<compile_context>
chip_gen: v7x
topology: tpu7x:2x2x1
jax: 0.10.0
libtpu: 0.0.40
codegen_flags: <defaults>
</compile_context>

<pallas_src>
import functools

import jax
import jax.numpy as jnp
import numpy as np
from jax import lax
from jax.experimental import pallas as pl
from jax.experimental.pallas import tpu as pltpu


def _mbconv_kernel(x_ref, w1_ref, wse_ref, w2_ref, bias_ref, p_ref, q_ref,
                   out_ref, taps_ref, *, K, H, W):
    """One grid step = B images; channels-first; lanes = B*H*W.

    x_ref   : (1, Cin, L)      f32, L = B*H*W (also the residual branch)
    w1_ref  : (Cexp, K*K*Cin)  bf16, conv1 weights, BN1 scale folded, transposed
    wse_ref : (2*Cexp, Cexp)   f32, SE squeeze/excite 1x1 weights (stacked, transposed)
    w2_ref  : (Cout, Cexp)     bf16, conv2 (1x1) weights, BN2 scale folded, transposed
    bias_ref: (Cexp, 4)        f32 packed shifts: col0=b1, col1=bc1, col2=bc2, col3=b2
    p_ref   : (L, B)           f32 per-image mean selector (1/HW inside image b, else 0)
    q_ref   : (B, L)           f32 per-image broadcast selector (1 inside image b, else 0)
    out_ref : (1, Cout, L)     f32
    taps_ref: (K*K*Cin, L)     f32 VMEM scratch holding the in-kernel im2col taps
    """
    cin = x_ref.shape[1]
    L = x_ref.shape[2]
    cexp = w1_ref.shape[0]
    cout = w2_ref.shape[0]
    HW = H * W
    pad = K // 2

    x = x_ref[0]                                            # (Cin, L) f32

    # lane -> (h, w) coordinate maps (per-image position). Any roll that would
    # cross a row / image boundary lands on a masked position, so images never
    # mix even though the roll is over the whole packed lane axis.
    lane = lax.broadcasted_iota(jnp.int32, (1, L), 1)
    if (W & (W - 1)) == 0 and (HW & (HW - 1)) == 0:         # power-of-two fast path
        ww = lane & (W - 1)
        hh = (lane & (HW - 1)) >> (W.bit_length() - 1)
    else:
        hw = lane % HW
        hh = hw // W
        ww = hw % W

    # ---- in-kernel im2col: K*K shifted + masked taps of the single tile ----
    for ki in range(K):
        for kj in range(K):
            di, dj = ki - pad, kj - pad
            t = ki * K + kj
            if di == 0 and dj == 0:
                tap = x
            else:
                shift = (-(di * W + dj)) % L                # tap[l] = x[l + di*W + dj]
                tap = pltpu.roll(x, shift=shift, axis=1)
                valid = None
                if di < 0:
                    valid = hh >= -di
                if di > 0:
                    c = hh < H - di
                    valid = c if valid is None else valid & c
                if dj < 0:
                    c = ww >= -dj
                    valid = c if valid is None else valid & c
                if dj > 0:
                    c = ww < W - dj
                    valid = c if valid is None else valid & c
                tap = tap * valid.astype(jnp.float32)       # zero the padding taps
            taps_ref[t * cin:(t + 1) * cin, :] = tap

    b1 = bias_ref[:, 0:1]                                   # (Cexp, 1)
    bc1 = bias_ref[:, 1:2]
    bc2 = bias_ref[:, 2:3]
    b2 = bias_ref[0:cout, 3:4]                              # (Cout, 1)

    # ---- conv1 (KxK "same", BN1 scale pre-folded) + shift + ReLU -----------
    # one fused bf16 MXU contraction: (Cexp, K*K*Cin) @ (K*K*Cin, B*HW)
    y = jnp.dot(w1_ref[...], taps_ref[...].astype(jnp.bfloat16),
                preferred_element_type=jnp.float32)
    y = jnp.maximum(y + b1, 0.0)                            # (Cexp, L) f32

    # ---- SE: per-image avg pool -> 1x1 -> ReLU -> 1x1 -> sigmoid -> gate ---
    # pool / broadcast use the precomputed selector matrices so the two SE 1x1
    # matmuls are batched over the B images: (Cexp, Cexp) @ (Cexp, B).
    pooled = jnp.dot(y, p_ref[...], preferred_element_type=jnp.float32)   # (Cexp, B)
    t1 = jnp.dot(wse_ref[0:cexp, :], pooled,
                 preferred_element_type=jnp.float32) + bc1
    t1 = jnp.maximum(t1, 0.0)
    t2 = jnp.dot(wse_ref[cexp:2 * cexp, :], t1,
                 preferred_element_type=jnp.float32) + bc2
    gate = jax.nn.sigmoid(t2)                               # (Cexp, B)
    gate_l = jnp.dot(gate, q_ref[...], preferred_element_type=jnp.float32)  # (Cexp, L)
    yg = (y * gate_l).astype(jnp.bfloat16)                  # (Cexp, L) bf16

    # ---- conv2 (1x1, BN2 scale pre-folded) + shift + ReLU ------------------
    z = jnp.dot(w2_ref[...], yg, preferred_element_type=jnp.float32)
    z = jnp.maximum(z + b2, 0.0)                            # (Cout, L)

    # ---- residual add from the exact f32 input; lane-dense store -----------
    out_ref[0] = x + z


def pack_params(params):
    """One-time algebraic fold / layout / dtype prep of the kernel operands."""
    w1 = params["w1"]                                       # (K, K, Cin, Cexp)
    K, _, cin, cexp = w1.shape
    cout = params["w2"].shape[1]

    # conv1: fold BN1 scale, flatten taps, transpose, store bf16 (MXU operand)
    w1_flat = w1.reshape(K * K * cin, cexp)
    w1t = (w1_flat * params["s1"]).T.astype(jnp.bfloat16)   # (Cexp, K*K*Cin)

    # SE 1x1 convs: transpose to (out, in), stack squeeze over excite (f32)
    wse = jnp.concatenate([params["wc1"].T, params["wc2"].T],
                          axis=0).astype(jnp.float32)       # (2*Cexp, Cexp)

    # conv2: fold BN2 scale, transpose, store bf16 (MXU operand)
    w2t = (params["w2"] * params["s2"]).T.astype(jnp.bfloat16)   # (Cout, Cexp)

    # pack the four additive shifts into one small VMEM operand
    bias = jnp.zeros((cexp, 4), jnp.float32)
    bias = bias.at[:, 0].set(params["b1"][0])
    bias = bias.at[:, 1].set(params["bc1"][0])
    bias = bias.at[:, 2].set(params["bc2"][0])
    bias = bias.at[0:cout, 3].set(params["b2"][0])

    return dict(w1t=w1t, wse=wse, w2t=w2t, bias=bias)


def _pick_block_batch(n, max_b=8):
    """Largest divisor of n <= max_b that keeps >= 2 grid steps when n >= 2
    (so both v7x TensorCores get work under dimension_semantics=('parallel',))."""
    best = 1
    for b in range(1, min(max_b, n) + 1):
        if n % b == 0 and (n < 2 or n // b >= 2):
            best = b
    return best


def mbconv_forward(x_nchw, packed, kernel_size, max_block_batch=8):
    N, C, H, W = x_nchw.shape
    K = kernel_size
    HW = H * W
    B = _pick_block_batch(N, max_block_batch)
    G = N // B
    L = B * HW
    kkc = K * K * C

    # layout plumbing only: channels-first, lanes = B*H*W per grid step.
    x = x_nchw.astype(jnp.float32)
    xw = x.reshape(G, B, C, HW).transpose(0, 2, 1, 3).reshape(G, C, L)

    # per-image selector constants (shape-only; computed once on host)
    img = np.arange(L) // HW
    p_mat = jnp.asarray((img[:, None] == np.arange(B)[None, :])
                        .astype(np.float32) / float(HW))    # (L, B)
    q_mat = jnp.asarray((img[None, :] == np.arange(B)[:, None])
                        .astype(np.float32))                # (B, L)

    kernel = functools.partial(_mbconv_kernel, K=K, H=H, W=W)

    def full(shape):
        nd = len(shape)
        return pl.BlockSpec(shape, lambda g, _nd=nd: (0,) * _nd)

    out = pl.pallas_call(
        kernel,
        out_shape=jax.ShapeDtypeStruct((G, C, L), jnp.float32),
        grid=(G,),
        in_specs=[
            pl.BlockSpec((1, C, L), lambda g: (g, 0, 0)),
            full(packed["w1t"].shape),
            full(packed["wse"].shape),
            full(packed["w2t"].shape),
            full(packed["bias"].shape),
            full(p_mat.shape),
            full(q_mat.shape),
        ],
        out_specs=pl.BlockSpec((1, C, L), lambda g: (g, 0, 0)),
        scratch_shapes=[pltpu.VMEM((kkc, L), jnp.float32)],
        compiler_params=pltpu.CompilerParams(
            dimension_semantics=("parallel",)),
    )(xw, packed["w1t"], packed["wse"], packed["w2t"], packed["bias"],
      p_mat, q_mat)

    return out.reshape(G, C, B, HW).transpose(0, 2, 1, 3).reshape(N, C, H, W)


def init_params(key, channels, expansion, kernel_size):
    cexp = int(channels * expansion)
    eps = 1e-5
    ks = jax.random.split(key, 12)

    # conv1 (bias=False because norm=BatchNorm2d); stored HWIO
    w1 = 0.1 * jax.random.normal(
        ks[0], (kernel_size, kernel_size, channels, cexp), jnp.float32)
    g1 = 1.0 + 0.1 * jax.random.normal(ks[1], (cexp,), jnp.float32)
    beta1 = 0.1 * jax.random.normal(ks[2], (cexp,), jnp.float32)
    # BN folded with running stats (mean=0, var=1) -> scale/shift
    s1 = (g1 / jnp.sqrt(1.0 + eps)).reshape(1, cexp)
    b1 = beta1.reshape(1, cexp)

    # SE 1x1 convs (with bias); stored as (in, out) matrices
    wc1 = 0.1 * jax.random.normal(ks[3], (cexp, cexp), jnp.float32)
    bc1 = (0.1 * jax.random.normal(ks[4], (cexp,), jnp.float32)).reshape(1, cexp)
    wc2 = 0.1 * jax.random.normal(ks[5], (cexp, cexp), jnp.float32)
    bc2 = (0.1 * jax.random.normal(ks[6], (cexp,), jnp.float32)).reshape(1, cexp)

    # conv2 1x1 (bias=False) + BN2
    w2 = 0.1 * jax.random.normal(ks[7], (cexp, channels), jnp.float32)
    g2 = 1.0 + 0.1 * jax.random.normal(ks[8], (channels,), jnp.float32)
    beta2 = 0.1 * jax.random.normal(ks[9], (channels,), jnp.float32)
    s2 = (g2 / jnp.sqrt(1.0 + eps)).reshape(1, channels)
    b2 = beta2.reshape(1, channels)

    return dict(w1=w1, s1=s1, b1=b1, wc1=wc1, bc1=bc1, wc2=wc2, bc2=bc2,
                w2=w2, s2=s2, b2=b2)


def mbconv_ref(x_nchw, params, kernel_size):
    """Pure-JAX f32 reference (same folded-BN semantics)."""
    x = jnp.transpose(x_nchw, (0, 2, 3, 1)).astype(jnp.float32)
    y = lax.conv_general_dilated(
        x, params["w1"], (1, 1), "SAME",
        dimension_numbers=("NHWC", "HWIO", "NHWC"))
    y = jnp.maximum(y * params["s1"] + params["b1"], 0.0)
    pooled = jnp.mean(y, axis=(1, 2), keepdims=True)
    t = jnp.maximum(
        jnp.einsum("nhwc,cd->nhwd", pooled, params["wc1"]) + params["bc1"], 0.0)
    t = jnp.einsum("nhwc,cd->nhwd", t, params["wc2"]) + params["bc2"]
    y = y * jax.nn.sigmoid(t)
    z = jnp.einsum("nhwc,cd->nhwd", y, params["w2"])
    z = jnp.maximum(z * params["s2"] + params["b2"], 0.0)
    out = x + z
    return jnp.transpose(out, (0, 3, 1, 2))


if __name__ == "__main__":
    N, C, H, W = 8, 4, 16, 16
    kernel_size, expansion = 3, 4

    key = jax.random.PRNGKey(0)
    kparam, kx = jax.random.split(key)
    params = init_params(kparam, C, expansion, kernel_size)
    packed = pack_params(params)
    x = jax.random.normal(kx, (N, C, H, W), jnp.float32)

    out = mbconv_forward(x, packed, kernel_size)
    out = jax.block_until_ready(out)

    ref = mbconv_ref(x, params, kernel_size)
    assert out.shape == (N, C, H, W)
    # The kernel runs the conv contractions with bf16 MXU operands (f32
    # accumulation); the reference is pure f32, so compare at bf16 tolerance.
    np.testing.assert_allclose(np.asarray(out), np.asarray(ref),
                               rtol=2e-2, atol=2e-2)
    print("KERNEL_OK")
</pallas_src>

<mosaic_0001>
module attributes {stable_mosaic.version = 11 : i64} {
  func.func @_mbconv_kernel(%arg0: i32, %arg1: memref<1x4x1024xf32, #tpu.memory_space<vmem>>, %arg2: memref<16x36xbf16, #tpu.memory_space<vmem>>, %arg3: memref<32x16xf32, #tpu.memory_space<vmem>>, %arg4: memref<4x16xbf16, #tpu.memory_space<vmem>>, %arg5: memref<16x4xf32, #tpu.memory_space<vmem>>, %arg6: memref<1024x4xf32, #tpu.memory_space<vmem>>, %arg7: memref<4x1024xf32, #tpu.memory_space<vmem>>, %arg8: memref<1x4x1024xf32, #tpu.memory_space<vmem>>, %arg9: memref<36x1024xf32, #tpu.memory_space<vmem>>) attributes {dimension_semantics = [#tpu.dimension_semantics<parallel>], iteration_bounds = array<i64: 2>, scalar_prefetch = 0 : i64, scratch_operands = 1 : i64, tpu.core_type = #tpu.core_type<tc>, window_params = [{transform_indices = @transform_0, window_bounds = array<i64: 1, 4, 1024>}, {pipeline_mode = #tpu.pipeline_mode<synchronous>, transform_indices = @transform_1, window_bounds = array<i64: 16, 36>}, {pipeline_mode = #tpu.pipeline_mode<synchronous>, transform_indices = @transform_2, window_bounds = array<i64: 32, 16>}, {pipeline_mode = #tpu.pipeline_mode<synchronous>, transform_indices = @transform_3, window_bounds = array<i64: 4, 16>}, {pipeline_mode = #tpu.pipeline_mode<synchronous>, transform_indices = @transform_4, window_bounds = array<i64: 16, 4>}, {pipeline_mode = #tpu.pipeline_mode<synchronous>, transform_indices = @transform_5, window_bounds = array<i64: 1024, 4>}, {pipeline_mode = #tpu.pipeline_mode<synchronous>, transform_indices = @transform_6, window_bounds = array<i64: 4, 1024>}, {transform_indices = @transform_7, window_bounds = array<i64: 1, 4, 1024>}]} {
    %c0 = arith.constant 0 : index
    %c0_0 = arith.constant 0 : index
    %c0_1 = arith.constant 0 : index
    %0 = vector.load %arg1[%c0, %c0_0, %c0_1] : memref<1x4x1024xf32, #tpu.memory_space<vmem>>, vector<1x4x1024xf32>
    %1 = vector.shape_cast %0 : vector<1x4x1024xf32> to vector<4x1024xf32>
    %2 = tpu.iota {dimensions = array<i32: 1>} : vector<1x1024xi32>
    %c15_i32 = arith.constant 15 : i32
    %3 = vector.broadcast %c15_i32 : i32 to vector<1x1024xi32>
    %4 = arith.andi %2, %3 : vector<1x1024xi32>
    %c255_i32 = arith.constant 255 : i32
    %5 = vector.broadcast %c255_i32 : i32 to vector<1x1024xi32>
    %6 = arith.andi %2, %5 : vector<1x1024xi32>
    %c4_i32 = arith.constant 4 : i32
    %7 = vector.broadcast %c4_i32 : i32 to vector<1x1024xi32>
    %8 = arith.shrsi %6, %7 : vector<1x1024xi32>
    %c17_i32 = arith.constant 17 : i32
    %9 = tpu.dynamic_rotate %1 by %c17_i32 dim 1 : vector<4x1024xf32>, i32 -> vector<4x1024xf32>
    %c1_i32 = arith.constant 1 : i32
    %10 = vector.broadcast %c1_i32 : i32 to vector<1x1024xi32>
    %11 = arith.cmpi sge, %8, %10 : vector<1x1024xi32>
    %c1_i32_2 = arith.constant 1 : i32
    %12 = vector.broadcast %c1_i32_2 : i32 to vector<1x1024xi32>
    %13 = arith.cmpi sge, %4, %12 : vector<1x1024xi32>
    %14 = arith.andi %11, %13 : vector<1x1024xi1>
    %15 = arith.extui %14 : vector<1x1024xi1> to vector<1x1024xi32>
    %16 = arith.sitofp %15 : vector<1x1024xi32> to vector<1x1024xf32>
    %17 = vector.broadcast %16 : vector<1x1024xf32> to vector<4x1024xf32>
    %18 = arith.mulf %9, %17 : vector<4x1024xf32>
    %c0_3 = arith.constant 0 : index
    %c0_4 = arith.constant 0 : index
    %19 = vector.load %arg9[%c0_3, %c0_4] : memref<36x1024xf32, #tpu.memory_space<vmem>>, vector<4x1024xf32>
    tpu.vector_store %arg9[%c0_3, %c0_4], %18 {strides = array<i32>} : memref<36x1024xf32, #tpu.memory_space<vmem>>, vector<4x1024xf32>,
    %c16_i32 = arith.constant 16 : i32
    %20 = tpu.dynamic_rotate %1 by %c16_i32 dim 1 : vector<4x1024xf32>, i32 -> vector<4x1024xf32>
    %c1_i32_5 = arith.constant 1 : i32
    %21 = vector.broadcast %c1_i32_5 : i32 to vector<1x1024xi32>
    %22 = arith.cmpi sge, %8, %21 : vector<1x1024xi32>
    %23 = arith.extui %22 : vector<1x1024xi1> to vector<1x1024xi32>
    %24 = arith.sitofp %23 : vector<1x1024xi32> to vector<1x1024xf32>
    %25 = vector.broadcast %24 : vector<1x1024xf32> to vector<4x1024xf32>
    %26 = arith.mulf %20, %25 : vector<4x1024xf32>
    %c4 = arith.constant 4 : index
    %c0_6 = arith.constant 0 : index
    %27 = vector.load %arg9[%c4, %c0_6] : memref<36x1024xf32, #tpu.memory_space<vmem>>, vector<4x1024xf32>
    tpu.vector_store %arg9[%c4, %c0_6], %26 {strides = array<i32>} : memref<36x1024xf32, #tpu.memory_space<vmem>>, vector<4x1024xf32>,
    %c15_i32_7 = arith.constant 15 : i32
    %28 = tpu.dynamic_rotate %1 by %c15_i32_7 dim 1 : vector<4x1024xf32>, i32 -> vector<4x1024xf32>
    %c1_i32_8 = arith.constant 1 : i32
    %29 = vector.broadcast %c1_i32_8 : i32 to vector<1x1024xi32>
    %30 = arith.cmpi sge, %8, %29 : vector<1x1024xi32>
    %c15_i32_9 = arith.constant 15 : i32
    %31 = vector.broadcast %c15_i32_9 : i32 to vector<1x1024xi32>
    %32 = arith.cmpi slt, %4, %31 : vector<1x1024xi32>
    %33 = arith.andi %30, %32 : vector<1x1024xi1>
    %34 = arith.extui %33 : vector<1x1024xi1> to vector<1x1024xi32>
    %35 = arith.sitofp %34 : vector<1x1024xi32> to vector<1x1024xf32>
    %36 = vector.broadcast %35 : vector<1x1024xf32> to vector<4x1024xf32>
    %37 = arith.mulf %28, %36 : vector<4x1024xf32>
    %c8 = arith.constant 8 : index
    %c0_10 = arith.constant 0 : index
    %38 = vector.load %arg9[%c8, %c0_10] : memref<36x1024xf32, #tpu.memory_space<vmem>>, vector<4x1024xf32>
    tpu.vector_store %arg9[%c8, %c0_10], %37 {strides = array<i32>} : memref<36x1024xf32, #tpu.memory_space<vmem>>, vector<4x1024xf32>,
    %c1_i32_11 = arith.constant 1 : i32
    %39 = tpu.dynamic_rotate %1 by %c1_i32_11 dim 1 : vector<4x1024xf32>, i32 -> vector<4x1024xf32>
    %c1_i32_12 = arith.constant 1 : i32
    %40 = vector.broadcast %c1_i32_12 : i32 to vector<1x1024xi32>
    %41 = arith.cmpi sge, %4, %40 : vector<1x1024xi32>
    %42 = arith.extui %41 : vector<1x1024xi1> to vector<1x1024xi32>
    %43 = arith.sitofp %42 : vector<1x1024xi32> to vector<1x1024xf32>
    %44 = vector.broadcast %43 : vector<1x1024xf32> to vector<4x1024xf32>
    %45 = arith.mulf %39, %44 : vector<4x1024xf32>
    %c12 = arith.constant 12 : index
    %c0_13 = arith.constant 0 : index
    %46 = vector.load %arg9[%c12, %c0_13] : memref<36x1024xf32, #tpu.memory_space<vmem>>, vector<4x1024xf32>
    tpu.vector_store %arg9[%c12, %c0_13], %45 {strides = array<i32>} : memref<36x1024xf32, #tpu.memory_space<vmem>>, vector<4x1024xf32>,
    %c16 = arith.constant 16 : index
    %c0_14 = arith.constant 0 : index
    %47 = vector.load %arg9[%c16, %c0_14] : memref<36x1024xf32, #tpu.memory_space<vmem>>, vector<4x1024xf32>
    tpu.vector_store %arg9[%c16, %c0_14], %1 {strides = array<i32>} : memref<36x1024xf32, #tpu.memory_space<vmem>>, vector<4x1024xf32>,
    %c1023_i32 = arith.constant 1023 : i32
    %48 = tpu.dynamic_rotate %1 by %c1023_i32 dim 1 : vector<4x1024xf32>, i32 -> vector<4x1024xf32>
    %c15_i32_15 = arith.constant 15 : i32
    %49 = vector.broadcast %c15_i32_15 : i32 to vector<1x1024xi32>
    %50 = arith.cmpi slt, %4, %49 : vector<1x1024xi32>
    %51 = arith.extui %50 : vector<1x1024xi1> to vector<1x1024xi32>
    %52 = arith.sitofp %51 : vector<1x1024xi32> to vector<1x1024xf32>
    %53 = vector.broadcast %52 : vector<1x1024xf32> to vector<4x1024xf32>
    %54 = arith.mulf %48, %53 : vector<4x1024xf32>
    %c20 = arith.constant 20 : index
    %c0_16 = arith.constant 0 : index
    %55 = vector.load %arg9[%c20, %c0_16] : memref<36x1024xf32, #tpu.memory_space<vmem>>, vector<4x1024xf32>
    tpu.vector_store %arg9[%c20, %c0_16], %54 {strides = array<i32>} : memref<36x1024xf32, #tpu.memory_space<vmem>>, vector<4x1024xf32>,
    %c1009_i32 = arith.constant 1009 : i32
    %56 = tpu.dynamic_rotate %1 by %c1009_i32 dim 1 : vector<4x1024xf32>, i32 -> vector<4x1024xf32>
    %c15_i32_17 = arith.constant 15 : i32
    %57 = vector.broadcast %c15_i32_17 : i32 to vector<1x1024xi32>
    %58 = arith.cmpi slt, %8, %57 : vector<1x1024xi32>
    %c1_i32_18 = arith.constant 1 : i32
    %59 = vector.broadcast %c1_i32_18 : i32 to vector<1x1024xi32>
    %60 = arith.cmpi sge, %4, %59 : vector<1x1024xi32>
    %61 = arith.andi %58, %60 : vector<1x1024xi1>
    %62 = arith.extui %61 : vector<1x1024xi1> to vector<1x1024xi32>
    %63 = arith.sitofp %62 : vector<1x1024xi32> to vector<1x1024xf32>
    %64 = vector.broadcast %63 : vector<1x1024xf32> to vector<4x1024xf32>
    %65 = arith.mulf %56, %64 : vector<4x1024xf32>
    %c24 = arith.constant 24 : index
    %c0_19 = arith.constant 0 : index
    %66 = vector.load %arg9[%c24, %c0_19] : memref<36x1024xf32, #tpu.memory_space<vmem>>, vector<4x1024xf32>
    tpu.vector_store %arg9[%c24, %c0_19], %65 {strides = array<i32>} : memref<36x1024xf32, #tpu.memory_space<vmem>>, vector<4x1024xf32>,
    %c1008_i32 = arith.constant 1008 : i32
    %67 = tpu.dynamic_rotate %1 by %c1008_i32 dim 1 : vector<4x1024xf32>, i32 -> vector<4x1024xf32>
    %c15_i32_20 = arith.constant 15 : i32
    %68 = vector.broadcast %c15_i32_20 : i32 to vector<1x1024xi32>
    %69 = arith.cmpi slt, %8, %68 : vector<1x1024xi32>
    %70 = arith.extui %69 : vector<1x1024xi1> to vector<1x1024xi32>
    %71 = arith.sitofp %70 : vector<1x1024xi32> to vector<1x1024xf32>
    %72 = vector.broadcast %71 : vector<1x1024xf32> to vector<4x1024xf32>
    %73 = arith.mulf %67, %72 : vector<4x1024xf32>
    %c28 = arith.constant 28 : index
    %c0_21 = arith.constant 0 : index
    %74 = vector.load %arg9[%c28, %c0_21] : memref<36x1024xf32, #tpu.memory_space<vmem>>, vector<4x1024xf32>
    tpu.vector_store %arg9[%c28, %c0_21], %73 {strides = array<i32>} : memref<36x1024xf32, #tpu.memory_space<vmem>>, vector<4x1024xf32>,
    %c1007_i32 = arith.constant 1007 : i32
    %75 = tpu.dynamic_rotate %1 by %c1007_i32 dim 1 : vector<4x1024xf32>, i32 -> vector<4x1024xf32>
    %c15_i32_22 = arith.constant 15 : i32
    %76 = vector.broadcast %c15_i32_22 : i32 to vector<1x1024xi32>
    %77 = arith.cmpi slt, %8, %76 : vector<1x1024xi32>
    %c15_i32_23 = arith.constant 15 : i32
    %78 = vector.broadcast %c15_i32_23 : i32 to vector<1x1024xi32>
    %79 = arith.cmpi slt, %4, %78 : vector<1x1024xi32>
    %80 = arith.andi %77, %79 : vector<1x1024xi1>
    %81 = arith.extui %80 : vector<1x1024xi1> to vector<1x1024xi32>
    %82 = arith.sitofp %81 : vector<1x1024xi32> to vector<1x1024xf32>
    %83 = vector.broadcast %82 : vector<1x1024xf32> to vector<4x1024xf32>
    %84 = arith.mulf %75, %83 : vector<4x1024xf32>
    %c32 = arith.constant 32 : index
    %c0_24 = arith.constant 0 : index
    %85 = vector.load %arg9[%c32, %c0_24] : memref<36x1024xf32, #tpu.memory_space<vmem>>, vector<4x1024xf32>
    tpu.vector_store %arg9[%c32, %c0_24], %84 {strides = array<i32>} : memref<36x1024xf32, #tpu.memory_space<vmem>>, vector<4x1024xf32>,
    %c0_25 = arith.constant 0 : index
    %c0_26 = arith.constant 0 : index
    %86 = vector.load %arg5[%c0_25, %c0_26] : memref<16x4xf32, #tpu.memory_space<vmem>>, vector<16x1xf32>
    %c0_27 = arith.constant 0 : index
    %c1 = arith.constant 1 : index
    %87 = vector.load %arg5[%c0_27, %c1] : memref<16x4xf32, #tpu.memory_space<vmem>>, vector<16x1xf32>
    %c0_28 = arith.constant 0 : index
    %c2 = arith.constant 2 : index
    %88 = vector.load %arg5[%c0_28, %c2] : memref<16x4xf32, #tpu.memory_space<vmem>>, vector<16x1xf32>
    %c0_29 = arith.constant 0 : index
    %c3 = arith.constant 3 : index
    %89 = vector.load %arg5[%c0_29, %c3] : memref<16x4xf32, #tpu.memory_space<vmem>>, vector<4x1xf32>
    %c0_30 = arith.constant 0 : index
    %c0_31 = arith.constant 0 : index
    %90 = vector.load %arg2[%c0_30, %c0_31] : memref<16x36xbf16, #tpu.memory_space<vmem>>, vector<16x36xbf16>
    %c0_32 = arith.constant 0 : index
    %c0_33 = arith.constant 0 : index
    %91 = vector.load %arg9[%c0_32, %c0_33] : memref<36x1024xf32, #tpu.memory_space<vmem>>, vector<36x1024xf32>
    %92 = arith.truncf %91 : vector<36x1024xf32> to vector<36x1024xbf16>
    %cst = arith.constant dense<0.000000e+00> : vector<16x1024xf32>
    %93 = tpu.matmul %90, %92, %cst {dimension_numbers = #tpu.dot_dimension_numbers<[1], [0], [0], [1], [0, 0, 1, 1], [], []>} : vector<16x36xbf16>, vector<36x1024xbf16>, vector<16x1024xf32> -> vector<16x1024xf32>
    %94 = vector.broadcast %86 : vector<16x1xf32> to vector<16x1024xf32>
    %95 = arith.addf %93, %94 : vector<16x1024xf32>
    %cst_34 = arith.constant 0.000000e+00 : f32
    %96 = vector.broadcast %cst_34 : f32 to vector<16x1024xf32>
    %97 = arith.maximumf %95, %96 : vector<16x1024xf32>
    %c0_35 = arith.constant 0 : index
    %c0_36 = arith.constant 0 : index
    %98 = vector.load %arg6[%c0_35, %c0_36] : memref<1024x4xf32, #tpu.memory_space<vmem>>, vector<1024x4xf32>
    %cst_37 = arith.constant dense<0.000000e+00> : vector<16x4xf32>
    %99 = tpu.matmul %97, %98, %cst_37 {dimension_numbers = #tpu.dot_dimension_numbers<[1], [0], [0], [1], [0, 0, 1, 1], [], []>} : vector<16x1024xf32>, vector<1024x4xf32>, vector<16x4xf32> -> vector<16x4xf32>
    %c0_38 = arith.constant 0 : index
    %c0_39 = arith.constant 0 : index
    %100 = vector.load %arg3[%c0_38, %c0_39] : memref<32x16xf32, #tpu.memory_space<vmem>>, vector<16x16xf32>
    %cst_40 = arith.constant dense<0.000000e+00> : vector<16x4xf32>
    %101 = tpu.matmul %100, %99, %cst_40 {dimension_numbers = #tpu.dot_dimension_numbers<[1], [0], [0], [1], [0, 0, 1, 1], [], []>} : vector<16x16xf32>, vector<16x4xf32>, vector<16x4xf32> -> vector<16x4xf32>
    %102 = vector.broadcast %87 : vector<16x1xf32> to vector<16x4xf32>
    %103 = arith.addf %101, %102 : vector<16x4xf32>
    %cst_41 = arith.constant 0.000000e+00 : f32
    %104 = vector.broadcast %cst_41 : f32 to vector<16x4xf32>
    %105 = arith.maximumf %103, %104 : vector<16x4xf32>
    %c16_42 = arith.constant 16 : index
    %c0_43 = arith.constant 0 : index
    %106 = vector.load %arg3[%c16_42, %c0_43] : memref<32x16xf32, #tpu.memory_space<vmem>>, vector<16x16xf32>
    %cst_44 = arith.constant dense<0.000000e+00> : vector<16x4xf32>
    %107 = tpu.matmul %106, %105, %cst_44 {dimension_numbers = #tpu.dot_dimension_numbers<[1], [0], [0], [1], [0, 0, 1, 1], [], []>} : vector<16x16xf32>, vector<16x4xf32>, vector<16x4xf32> -> vector<16x4xf32>
    %108 = vector.broadcast %88 : vector<16x1xf32> to vector<16x4xf32>
    %109 = arith.addf %107, %108 : vector<16x4xf32>
    %110 = arith.negf %109 : vector<16x4xf32>
    %111 = math.exp %110 : vector<16x4xf32>
    %cst_45 = arith.constant 1.000000e+00 : f32
    %112 = vector.broadcast %cst_45 : f32 to vector<16x4xf32>
    %113 = arith.addf %112, %111 : vector<16x4xf32>
    %114 = arith.divf %112, %113 : vector<16x4xf32>
    %c0_46 = arith.constant 0 : index
    %c0_47 = arith.constant 0 : index
    %115 = vector.load %arg7[%c0_46, %c0_47] : memref<4x1024xf32, #tpu.memory_space<vmem>>, vector<4x1024xf32>
    %cst_48 = arith.constant dense<0.000000e+00> : vector<16x1024xf32>
    %116 = tpu.matmul %114, %115, %cst_48 {dimension_numbers = #tpu.dot_dimension_numbers<[1], [0], [0], [1], [0, 0, 1, 1], [], []>} : vector<16x4xf32>, vector<4x1024xf32>, vector<16x1024xf32> -> vector<16x1024xf32>
    %117 = arith.mulf %97, %116 : vector<16x1024xf32>
    %118 = arith.truncf %117 : vector<16x1024xf32> to vector<16x1024xbf16>
    %c0_49 = arith.constant 0 : index
    %c0_50 = arith.constant 0 : index
    %119 = vector.load %arg4[%c0_49, %c0_50] : memref<4x16xbf16, #tpu.memory_space<vmem>>, vector<4x16xbf16>
    %cst_51 = arith.constant dense<0.000000e+00> : vector<4x1024xf32>
    %120 = tpu.matmul %119, %118, %cst_51 {dimension_numbers = #tpu.dot_dimension_numbers<[1], [0], [0], [1], [0, 0, 1, 1], [], []>} : vector<4x16xbf16>, vector<16x1024xbf16>, vector<4x1024xf32> -> vector<4x1024xf32>
    %121 = vector.broadcast %89 : vector<4x1xf32> to vector<4x1024xf32>
    %122 = arith.addf %120, %121 : vector<4x1024xf32>
    %cst_52 = arith.constant 0.000000e+00 : f32
    %123 = vector.broadcast %cst_52 : f32 to vector<4x1024xf32>
    %124 = arith.maximumf %122, %123 : vector<4x1024xf32>
    %125 = arith.addf %1, %124 : vector<4x1024xf32>
    %c0_53 = arith.constant 0 : index
    %c0_54 = arith.constant 0 : index
    %c0_55 = arith.constant 0 : index
    %126 = vector.load %arg8[%c0_53, %c0_54, %c0_55] : memref<1x4x1024xf32, #tpu.memory_space<vmem>>, vector<1x4x1024xf32>
    %127 = vector.shape_cast %126 : vector<1x4x1024xf32> to vector<4x1024xf32>
    %128 = vector.shape_cast %125 : vector<4x1024xf32> to vector<1x4x1024xf32>
    tpu.vector_store %arg8[%c0_53, %c0_54, %c0_55], %128 {strides = array<i32>} : memref<1x4x1024xf32, #tpu.memory_space<vmem>>, vector<1x4x1024xf32>,
    return
  }
  func.func @transform_0(%arg0: i32) -> (i32, i32, i32) {
    %c0_i32 = arith.constant 0 : i32
    %c0_i32_0 = arith.constant 0 : i32
    %c0_i32_1 = arith.constant 0 : i32
    return %arg0, %c0_i32, %c0_i32_0 : i32, i32, i32
  }
  func.func @transform_1(%arg0: i32) -> (i32, i32) {
    %c0_i32 = arith.constant 0 : i32
    %c0_i32_0 = arith.constant 0 : i32
    %c0_i32_1 = arith.constant 0 : i32
    return %c0_i32, %c0_i32_0 : i32, i32
  }
  func.func @transform_2(%arg0: i32) -> (i32, i32) {
    %c0_i32 = arith.constant 0 : i32
    %c0_i32_0 = arith.constant 0 : i32
    %c0_i32_1 = arith.constant 0 : i32
    return %c0_i32, %c0_i32_0 : i32, i32
  }
  func.func @transform_3(%arg0: i32) -> (i32, i32) {
    %c0_i32 = arith.constant 0 : i32
    %c0_i32_0 = arith.constant 0 : i32
    %c0_i32_1 = arith.constant 0 : i32
    return %c0_i32, %c0_i32_0 : i32, i32
  }
  func.func @transform_4(%arg0: i32) -> (i32, i32) {
    %c0_i32 = arith.constant 0 : i32
    %c0_i32_0 = arith.constant 0 : i32
    %c0_i32_1 = arith.constant 0 : i32
    return %c0_i32, %c0_i32_0 : i32, i32
  }
  func.func @transform_5(%arg0: i32) -> (i32, i32) {
    %c0_i32 = arith.constant 0 : i32
    %c0_i32_0 = arith.constant 0 : i32
    %c0_i32_1 = arith.constant 0 : i32
    return %c0_i32, %c0_i32_0 : i32, i32
  }
  func.func @transform_6(%arg0: i32) -> (i32, i32) {
    %c0_i32 = arith.constant 0 : i32
    %c0_i32_0 = arith.constant 0 : i32
    %c0_i32_1 = arith.constant 0 : i32
    return %c0_i32, %c0_i32_0 : i32, i32
  }
  func.func @transform_7(%arg0: i32) -> (i32, i32, i32) {
    %c0_i32 = arith.constant 0 : i32
    %c0_i32_0 = arith.constant 0 : i32
    %c0_i32_1 = arith.constant 0 : i32
    return %arg0, %c0_i32, %c0_i32_0 : i32, i32, i32
  }
}

</mosaic_0001>

<llo_original>
// kernel: tpu_custom_call.1
$region0: #{tpu_custom_call.1}
  #allocation0 [shape = 'u32[]', space=smem, size = 0x4, offset = 0x4, fixed_abs, tag = 'smem constant byte address 0x4 - core index']
  #allocation1 [shape = 'u32[144,128]{1,0:T(1,128)}', space=vmem, size = 0x12000, scoped, tag = 'internal scratch']
  #allocation2 [shape = 'f32[36,1024]{1,0:T(8,128)}', space=vmem, size = 0x28000, scoped, tag = 'scratch operand']
  %s0 = inlined_call_operand.vmem [shape: f32[2,4,1024], index: 0, kind: input, shape index: {}]
  %s1 = inlined_call_operand.vmem [shape: bf16[16,36], index: 1, kind: input, shape index: {}]
  %s2 = inlined_call_operand.vmem [shape: f32[32,16], index: 2, kind: input, shape index: {}]
  %s3 = inlined_call_operand.vmem [shape: bf16[4,16], index: 3, kind: input, shape index: {}]
  %s4 = inlined_call_operand.vmem [shape: f32[16,4], index: 4, kind: input, shape index: {}]
  %s5 = inlined_call_operand.vmem [shape: f32[1024,4], index: 5, kind: input, shape index: {}]
  %s6 = inlined_call_operand.vmem [shape: f32[4,1024], index: 6, kind: input, shape index: {}]
  %s7 = inlined_call_operand.hbm [shape: f32[2,4,1024], index: 7, kind: output, shape index: {}]
  %s8 = sld [smem:[#allocation0]]
  $region61: #{tpu_custom_call.1} parent=0
    _
  %s10 = ssub.s32 1, %s8
  %s11 = scalar_select 0, %s10, %s8
  $region1: #{tpu_custom_call.1} parent=0
    #allocation3 [shape = 'u8[32768]{0}', space=vmem, size = 0x8000, scoped, tag = 'output window, operand 0']
    #allocation4 [shape = 's32[2]{0}', space=sflag, size = 0x8, scoped, tag = 'scoped memory for tpu_custom_call.1']
    %12 = vsyncpa [#allocation4], 0
    %s13 = scalar_lea.sflag [#allocation4], 1
    %14 = vsyncpa %s13, 0
    loop: start=0, step=1, limit=4
    $region2: #{tpu_custom_call.1} parent=1 // loop_pre_header
      _
    $region3: #{tpu_custom_call.1} parent=1 // loop_header
      %s16 = sphi 0, %s20
      %p17 = scmp.ge.s32.totalorder %s16, 4
      %s26 = sphi 0, %s28
      %s29 = sphi 0, %s26
      %s30 = sphi 0, %s29
      %s46 = sphi 0, %s30
      %s50 = sphi 0, %s50
      %s52 = sphi 0, %s50
      %s53 = sphi 0, %s52
      %s67 = sphi 0, %s53
      %s71 = sphi 0, %s71
      %s73 = sphi 0, %s71
      %s74 = sphi 0, %s73
      %s88 = sphi 0, %s74
      %s92 = sphi 0, %s92
      %s94 = sphi 0, %s92
      %s95 = sphi 0, %s94
      %s109 = sphi 0, %s95
      %s113 = sphi 0, %s113
      %s115 = sphi 0, %s113
      %s116 = sphi 0, %s115
      %s130 = sphi 0, %s116
      %s134 = sphi 0, %s134
      %s136 = sphi 0, %s134
      %s137 = sphi 0, %s136
      %s151 = sphi 0, %s137
      %s155 = sphi 0, %s155
      %s157 = sphi 0, %s155
      %s158 = sphi 0, %s157
      %s172 = sphi 0, %s158
      %s178 = sphi 0, %s180
      %s181 = sphi 0, %s178
      %s182 = sphi 0, %s181
      %s198 = sphi 0, %s182
    $region4: #{tpu_custom_call.1} parent=1 // loop_header_branch
      %19 = sbr.rel (%p17) target = $region8
    $region5: #{tpu_custom_call.1} parent=1 // loop_body
      %s21 = ssub.s32 %s16, 1
      %s22 = ssub.s32 %s16, 2
      %s23 = sadd.s32 %s16, 1
      %s24 = ssub.s32 %s16, %s23
      %p25 = scmp.eq.s32.totalorder %s24, 0
      %s27 = sadd.s32 %s26, 1
      %s28 = scalar_select %p25, %s26, %s27
      %p31 = pneg %p25
      %p32 = scmp.eq.s32.totalorder %s16, 1
      %p33 = por %p31, %p32
      %p34 = scmp.ne.s32.totalorder %s26, %s29
      %p35 = scmp.eq.s32.totalorder %s16, 0
      %p36 = por %p34, %p35
      %p37 = scmp.ne.s32.totalorder %s26, %s29
      %p38 = scmp.eq.s32.totalorder %s21, 1
      %p39 = por %p37, %p38
      %p40 = scmp.ne.s32.totalorder %s29, %s30
      %p41 = scmp.eq.s32.totalorder %s21, 0
      %p42 = por %p40, %p41
      %p43 = scmp.ne.s32.totalorder %s29, %s30
      %p44 = scmp.eq.s32.totalorder %s22, 1
      %p45 = por %p43, %p44
      %p47 = scmp.ne.s32.totalorder %s30, %s46
      %p48 = scmp.eq.s32.totalorder %s22, 0
      %p49 = por %p47, %p48
      %s51 = sadd.s32 %s50, 1
      %p54 = scmp.eq.s32.totalorder %s16, 1
      %p55 = scmp.ne.s32.totalorder %s50, %s52
      %p56 = scmp.eq.s32.totalorder %s16, 0
      %p57 = por %p55, %p56
      %p58 = scmp.ne.s32.totalorder %s50, %s52
      %p59 = scmp.eq.s32.totalorder %s21, 1
      %p60 = por %p58, %p59
      %p61 = scmp.ne.s32.totalorder %s52, %s53
      %p62 = scmp.eq.s32.totalorder %s21, 0
      %p63 = por %p61, %p62
      %p64 = scmp.ne.s32.totalorder %s52, %s53
      %p65 = scmp.eq.s32.totalorder %s22, 1
      %p66 = por %p64, %p65
      %p68 = scmp.ne.s32.totalorder %s53, %s67
      %p69 = scmp.eq.s32.totalorder %s22, 0
      %p70 = por %p68, %p69
      %s72 = sadd.s32 %s71, 1
      %p75 = scmp.eq.s32.totalorder %s16, 1
      %p76 = scmp.ne.s32.totalorder %s71, %s73
      %p77 = scmp.eq.s32.totalorder %s16, 0
      %p78 = por %p76, %p77
      %p79 = scmp.ne.s32.totalorder %s71, %s73
      %p80 = scmp.eq.s32.totalorder %s21, 1
      %p81 = por %p79, %p80
      %p82 = scmp.ne.s32.totalorder %s73, %s74
      %p83 = scmp.eq.s32.totalorder %s21, 0
      %p84 = por %p82, %p83
      %p85 = scmp.ne.s32.totalorder %s73, %s74
      %p86 = scmp.eq.s32.totalorder %s22, 1
      %p87 = por %p85, %p86
      %p89 = scmp.ne.s32.totalorder %s74, %s88
      %p90 = scmp.eq.s32.totalorder %s22, 0
      %p91 = por %p89, %p90
      %s93 = sadd.s32 %s92, 1
      %p96 = scmp.eq.s32.totalorder %s16, 1
      %p97 = scmp.ne.s32.totalorder %s92, %s94
      %p98 = scmp.eq.s32.totalorder %s16, 0
      %p99 = por %p97, %p98
      %p100 = scmp.ne.s32.totalorder %s92, %s94
      %p101 = scmp.eq.s32.totalorder %s21, 1
      %p102 = por %p100, %p101
      %p103 = scmp.ne.s32.totalorder %s94, %s95
      %p104 = scmp.eq.s32.totalorder %s21, 0
      %p105 = por %p103, %p104
      %p106 = scmp.ne.s32.totalorder %s94, %s95
      %p107 = scmp.eq.s32.totalorder %s22, 1
      %p108 = por %p106, %p107
      %p110 = scmp.ne.s32.totalorder %s95, %s109
      %p111 = scmp.eq.s32.totalorder %s22, 0
      %p112 = por %p110, %p111
      %s114 = sadd.s32 %s113, 1
      %p117 = scmp.eq.s32.totalorder %s16, 1
      %p118 = scmp.ne.s32.totalorder %s113, %s115
      %p119 = scmp.eq.s32.totalorder %s16, 0
      %p120 = por %p118, %p119
      %p121 = scmp.ne.s32.totalorder %s113, %s115
      %p122 = scmp.eq.s32.totalorder %s21, 1
      %p123 = por %p121, %p122
      %p124 = scmp.ne.s32.totalorder %s115, %s116
      %p125 = scmp.eq.s32.totalorder %s21, 0
      %p126 = por %p124, %p125
      %p127 = scmp.ne.s32.totalorder %s115, %s116
      %p128 = scmp.eq.s32.totalorder %s22, 1
      %p129 = por %p127, %p128
      %p131 = scmp.ne.s32.totalorder %s116, %s130
      %p132 = scmp.eq.s32.totalorder %s22, 0
      %p133 = por %p131, %p132
      %s135 = sadd.s32 %s134, 1
      %p138 = scmp.eq.s32.totalorder %s16, 1
      %p139 = scmp.ne.s32.totalorder %s134, %s136
      %p140 = scmp.eq.s32.totalorder %s16, 0
      %p141 = por %p139, %p140
      %p142 = scmp.ne.s32.totalorder %s134, %s136
      %p143 = scmp.eq.s32.totalorder %s21, 1
      %p144 = por %p142, %p143
      %p145 = scmp.ne.s32.totalorder %s136, %s137
      %p146 = scmp.eq.s32.totalorder %s21, 0
      %p147 = por %p145, %p146
      %p148 = scmp.ne.s32.totalorder %s136, %s137
      %p149 = scmp.eq.s32.totalorder %s22, 1
      %p150 = por %p148, %p149
      %p152 = scmp.ne.s32.totalorder %s137, %s151
      %p153 = scmp.eq.s32.totalorder %s22, 0
      %p154 = por %p152, %p153
      %s156 = sadd.s32 %s155, 1
      %p159 = scmp.eq.s32.totalorder %s16, 1
      %p160 = scmp.ne.s32.totalorder %s155, %s157
      %p161 = scmp.eq.s32.totalorder %s16, 0
      %p162 = por %p160, %p161
      %p163 = scmp.ne.s32.totalorder %s155, %s157
      %p164 = scmp.eq.s32.totalorder %s21, 1
      %p165 = por %p163, %p164
      %p166 = scmp.ne.s32.totalorder %s157, %s158
      %p167 = scmp.eq.s32.totalorder %s21, 0
      %p168 = por %p166, %p167
      %p169 = scmp.ne.s32.totalorder %s157, %s158
      %p170 = scmp.eq.s32.totalorder %s22, 1
      %p171 = por %p169, %p170
      %p173 = scmp.ne.s32.totalorder %s158, %s172
      %p174 = scmp.eq.s32.totalorder %s22, 0
      %p175 = por %p173, %p174
      %s176 = ssub.s32 %s16, %s23
      %p177 = scmp.eq.s32.totalorder %s176, 0
      %s179 = sadd.s32 %s178, 1
      %s180 = scalar_select %p177, %s178, %s179
      %p183 = pneg %p177
      %p184 = scmp.eq.s32.totalorder %s16, 1
      %p185 = por %p183, %p184
      %p186 = scmp.ne.s32.totalorder %s178, %s181
      %p187 = scmp.eq.s32.totalorder %s16, 0
      %p188 = por %p186, %p187
      %p189 = scmp.ne.s32.totalorder %s178, %s181
      %p190 = scmp.eq.s32.totalorder %s21, 1
      %p191 = por %p189, %p190
      %p192 = scmp.ne.s32.totalorder %s181, %s182
      %p193 = scmp.eq.s32.totalorder %s21, 0
      %p194 = por %p192, %p193
      %p195 = scmp.ne.s32.totalorder %s181, %s182
      %p196 = scmp.eq.s32.totalorder %s22, 1
      %p197 = por %p195, %p196
      %p199 = scmp.ne.s32.totalorder %s182, %s198
      %p200 = scmp.eq.s32.totalorder %s22, 0
      %p201 = por %p199, %p200
      %p202 = scmp.le.s32.totalorder 1, %s16
      %p203 = scmp.lt.s32.totalorder %s16, 3
      %p204 = pnand %p202, %p203
      %p205 = pneg %p204
      // Predicated region
      $region9: #{tpu_custom_call.1} parent=5 // pred_check
        _
      $region10: #{tpu_custom_call.1} parent=5 // pred_check_branch
        %207 = sbr.rel (%p204) target = $region12
      $region11: #{tpu_custom_call.1} parent=5 // pred_region
        %s208 = ssub.s32 %s16, 1
        // Predicated region
        $region13: #{tpu_custom_call.1} parent=11 // pred_check
          %p209 = pneg %p63
        $region14: #{tpu_custom_call.1} parent=11 // pred_check_branch
          %211 = sbr.rel (%p209) target = $region16
        $region15: #{tpu_custom_call.1} parent=11 // pred_region
          _
        $region16: #{tpu_custom_call.1} parent=11 // pred_fallthru
          _
        // Predicated region
        $region17: #{tpu_custom_call.1} parent=11 // pred_check
          %p212 = pneg %p84
        $region18: #{tpu_custom_call.1} parent=11 // pred_check_branch
          %214 = sbr.rel (%p212) target = $region20
        $region19: #{tpu_custom_call.1} parent=11 // pred_region
          _
        $region20: #{tpu_custom_call.1} parent=11 // pred_fallthru
          _
        // Predicated region
        $region21: #{tpu_custom_call.1} parent=11 // pred_check
          %p215 = pneg %p105
        $region22: #{tpu_custom_call.1} parent=11 // pred_check_branch
          %217 = sbr.rel (%p215) target = $region24
        $region23: #{tpu_custom_call.1} parent=11 // pred_region
          _
        $region24: #{tpu_custom_call.1} parent=11 // pred_fallthru
          _
        // Predicated region
        $region25: #{tpu_custom_call.1} parent=11 // pred_check
          %p218 = pneg %p126
        $region26: #{tpu_custom_call.1} parent=11 // pred_check_branch
          %220 = sbr.rel (%p218) target = $region28
        $region27: #{tpu_custom_call.1} parent=11 // pred_region
          _
        $region28: #{tpu_custom_call.1} parent=11 // pred_fallthru
          _
        // Predicated region
        $region29: #{tpu_custom_call.1} parent=11 // pred_check
          %p221 = pneg %p147
        $region30: #{tpu_custom_call.1} parent=11 // pred_check_branch
          %223 = sbr.rel (%p221) target = $region32
        $region31: #{tpu_custom_call.1} parent=11 // pred_region
          _
        $region32: #{tpu_custom_call.1} parent=11 // pred_fallthru
          _
        // Predicated region
        $region33: #{tpu_custom_call.1} parent=11 // pred_check
          %p224 = pneg %p168
        $region34: #{tpu_custom_call.1} parent=11 // pred_check_branch
          %226 = sbr.rel (%p224) target = $region36
        $region35: #{tpu_custom_call.1} parent=11 // pred_region
          _
        $region36: #{tpu_custom_call.1} parent=11 // pred_fallthru
          _
      $region12: #{tpu_custom_call.1} parent=5 // pred_fallthru
        _
      %p227 = scmp.lt.s32.totalorder %s16, 2
      // Predicated region
      $region37: #{tpu_custom_call.1} parent=5 // pred_check
        %p228 = pneg %p227
      $region38: #{tpu_custom_call.1} parent=5 // pred_check_branch
        %230 = sbr.rel (%p228) target = $region40
      $region39: #{tpu_custom_call.1} parent=5 // pred_region
        // Predicated region
        $region41: #{tpu_custom_call.1} parent=39 // pred_check
          %p231 = pneg %p36
        $region42: #{tpu_custom_call.1} parent=39 // pred_check_branch
          %233 = sbr.rel (%p231) target = $region44
        $region43: #{tpu_custom_call.1} parent=39 // pred_region
          %p234 = scmp.lt.s32.totalorder %s16, 1
          %s235 = scalar_select %p234, %s16, 1
          %s236 = smul.addr %s235, 8
          %s237 = smul.addr %s236, 4
          %s238 = scalar_lea.vmem %s0, %s237
        $region44: #{tpu_custom_call.1} parent=39 // pred_fallthru
          _
      $region40: #{tpu_custom_call.1} parent=5 // pred_fallthru
        _
      %p239 = scmp.le.s32.totalorder 1, %s16
      %p240 = scmp.lt.s32.totalorder %s16, 3
      %p241 = pnand %p239, %p240
      %p242 = pneg %p241
      // Predicated region
      $region45: #{tpu_custom_call.1} parent=5 // pred_check
        _
      $region46: #{tpu_custom_call.1} parent=5 // pred_check_branch
        %244 = sbr.rel (%p241) target = $region48
      $region47: #{tpu_custom_call.1} parent=5 // pred_region
        %s245 = ssub.s32 %s16, 1
        %p246 = scmp.lt.s32.totalorder %s21, 1
        %s247 = scalar_select %p246, %s21, 1
        %s248 = smul.addr %s247, 8
        %s249 = smul.addr %s248, 4
        %s250 = scalar_lea.vmem %s0, %s249
        %p251 = pneg %p42
        %p252 = pneg %p39
        %p253 = pneg %p63
        %p254 = pneg %p60
        %p255 = pneg %p84
        %p256 = pneg %p81
        %p257 = pneg %p105
        %p258 = pneg %p102
        %p259 = pneg %p126
        %p260 = pneg %p123
        %p261 = pneg %p147
        %p262 = pneg %p144
        %p263 = pneg %p168
        %p264 = pneg %p165
        %p265 = pneg %p194
        %p266 = pneg %p191
        %s267 = sand.u32 %s181, 1
        %s268 = scalar_lea.sflag [#allocation4], %s267
        %s269 = sand.u32 %s181, 1
        %s270 = smul.addr %s269, 32
        %s271 = scalar_lea.vmem [#allocation3], %s270
        %p272 = scmp.lt.s32.totalorder %s21, 1
        %s273 = scalar_select %p272, %s21, 1
        %s274 = smul.addr %s273, 8
        %s275 = smul.addr %s274, 4
        %s276 = scalar_lea.vmem %s0, %s275
        %v278 = vld [vmem:[%s276] sm:$0xff]
        %v279 = vld [vmem:[%s276 + $0x8] sm:$0xff]
        %v280 = vld [vmem:[%s276 + $0x10] sm:$0xff]
        %v281 = vld [vmem:[%s276 + $0x18] sm:$0xff]
        %v282 = vlaneseq
        %v283 = vand.u32 %v282, 127
        %v284 = vadd.s32 %v283, 128
        %v285 = vadd.s32 %v283, 256
        %v286 = vadd.s32 %v283, 384
        %v287 = vadd.s32 %v283, 512
        %v288 = vadd.s32 %v283, 640
        %v289 = vadd.s32 %v283, 768
        %v290 = vadd.s32 %v283, 896
        %v291 = vand.u32 %v283, 15
        %v292 = vand.u32 %v284, 15
        %v293 = vand.u32 %v285, 15
        %v294 = vand.u32 %v286, 15
        %v295 = vand.u32 %v287, 15
        %v296 = vand.u32 %v288, 15
        %v297 = vand.u32 %v289, 15
        %v298 = vand.u32 %v290, 15
        %v299 = vand.u32 %v283, 255
        %v300 = vand.u32 %v284, 255
        %v301 = vand.u32 %v285, 255
        %v302 = vand.u32 %v286, 255
        %v303 = vand.u32 %v287, 255
        %v304 = vand.u32 %v288, 255
        %v305 = vand.u32 %v289, 255
        %v306 = vand.u32 %v290, 255
        %v307 = vshra.s32 %v299, 4
        %v308 = vshra.s32 %v300, 4
        %v309 = vshra.s32 %v301, 4
        %v310 = vshra.s32 %v302, 4
        %v311 = vshra.s32 %v303, 4
        %v312 = vshra.s32 %v304, 4
        %v313 = vshra.s32 %v305, 4
        %v314 = vshra.s32 %v306, 4
        %v319 = vcombine.high %v278, %v278
        %v320 = vcombine.high %v279, %v279
        %v321 = vcombine.high %v280, %v280
        %v322 = vcombine.high %v281, %v281
        %327 = vrot.lane.b32.xlu0 %v278, 17
        %v328 = vpop.permute.xlu0 %327
        %329 = vrot.lane.b32.xlu0 %v319, 17
        %v330 = vpop.permute.xlu0 %329
        %331 = vrot.lane.b32.xlu0 %v279, 17
        %v332 = vpop.permute.xlu0 %331
        %333 = vrot.lane.b32.xlu0 %v320, 17
        %v334 = vpop.permute.xlu0 %333
        %335 = vrot.lane.b32.xlu0 %v280, 17
        %v336 = vpop.permute.xlu0 %335
        %337 = vrot.lane.b32.xlu0 %v321, 17
        %v338 = vpop.permute.xlu0 %337
        %339 = vrot.lane.b32.xlu0 %v281, 17
        %v340 = vpop.permute.xlu0 %339
        %341 = vrot.lane.b32.xlu0 %v322, 17
        %v342 = vpop.permute.xlu0 %341
        %vm343 = vcmp.lt.s32.totalorder %v283, 17
        %v344 = vsel %vm343, %v340, %v342
        %v345 = vsel %vm343, %v338, %v340
        %v346 = vsel %vm343, %v336, %v338
        %v347 = vsel %vm343, %v334, %v336
        %v348 = vsel %vm343, %v332, %v334
        %v349 = vsel %vm343, %v330, %v332
        %v350 = vsel %vm343, %v328, %v330
        %v351 = vsel %vm343, %v342, %v328
        %vm352 = vcmp.ge.s32.totalorder %v307, 1
        %vm353 = vcmp.ge.s32.totalorder %v308, 1
        %vm354 = vcmp.ge.s32.totalorder %v309, 1
        %vm355 = vcmp.ge.s32.totalorder %v310, 1
        %vm356 = vcmp.ge.s32.totalorder %v311, 1
        %vm357 = vcmp.ge.s32.totalorder %v312, 1
        %vm358 = vcmp.ge.s32.totalorder %v313, 1
        %vm359 = vcmp.ge.s32.totalorder %v314, 1
        %vm360 = vcmp.ge.s32.totalorder %v291, 1
        %vm361 = vcmp.ge.s32.totalorder %v292, 1
        %vm362 = vcmp.ge.s32.totalorder %v293, 1
        %vm363 = vcmp.ge.s32.totalorder %v294, 1
        %vm364 = vcmp.ge.s32.totalorder %v295, 1
        %vm365 = vcmp.ge.s32.totalorder %v296, 1
        %vm366 = vcmp.ge.s32.totalorder %v297, 1
        %vm367 = vcmp.ge.s32.totalorder %v298, 1
        %vm368 = vmand %vm352, %vm360
        %vm369 = vmand %vm353, %vm361
        %vm370 = vmand %vm354, %vm362
        %vm371 = vmand %vm355, %vm363
        %vm372 = vmand %vm356, %vm364
        %vm373 = vmand %vm357, %vm365
        %vm374 = vmand %vm358, %vm366
        %vm375 = vmand %vm359, %vm367
        %v376 = vsel %vm368, 1, 0
        %v377 = vsel %vm369, 1, 0
        %v378 = vsel %vm370, 1, 0
        %v379 = vsel %vm371, 1, 0
        %v380 = vsel %vm372, 1, 0
        %v381 = vsel %vm373, 1, 0
        %v382 = vsel %vm374, 1, 0
        %v383 = vsel %vm375, 1, 0
        %v384 = vcvt.s32.f32 %v376
        %v385 = vcvt.s32.f32 %v377
        %v386 = vcvt.s32.f32 %v378
        %v387 = vcvt.s32.f32 %v379
        %v388 = vcvt.s32.f32 %v380
        %v389 = vcvt.s32.f32 %v381
        %v390 = vcvt.s32.f32 %v382
        %v391 = vcvt.s32.f32 %v383
        %v392 = vmul.f32 %v351, %v384
        %v393 = vmul.f32 %v350, %v385
        %v394 = vmul.f32 %v349, %v386
        %v395 = vmul.f32 %v348, %v387
        %v396 = vmul.f32 %v347, %v388
        %v397 = vmul.f32 %v346, %v389
        %v398 = vmul.f32 %v345, %v390
        %v399 = vmul.f32 %v344, %v391
        %400 = vst [vmem:[#allocation2] sm:$0xf] %v392
        %401 = vst [vmem:[#allocation2 + $0x8] sm:$0xf] %v393
        %402 = vst [vmem:[#allocation2 + $0x10] sm:$0xf] %v394
        %403 = vst [vmem:[#allocation2 + $0x18] sm:$0xf] %v395
        %404 = vst [vmem:[#allocation2 + $0x20] sm:$0xf] %v396
        %405 = vst [vmem:[#allocation2 + $0x28] sm:$0xf] %v397
        %406 = vst [vmem:[#allocation2 + $0x30] sm:$0xf] %v398
        %407 = vst [vmem:[#allocation2 + $0x38] sm:$0xf] %v399
        %408 = vrot.lane.b32.xlu0 %v278, 16
        %v409 = vpop.permute.xlu0 %408
        %410 = vrot.lane.b32.xlu0 %v319, 16
        %v411 = vpop.permute.xlu0 %410
        %412 = vrot.lane.b32.xlu0 %v279, 16
        %v413 = vpop.permute.xlu0 %412
        %414 = vrot.lane.b32.xlu0 %v320, 16
        %v415 = vpop.permute.xlu0 %414
        %416 = vrot.lane.b32.xlu0 %v280, 16
        %v417 = vpop.permute.xlu0 %416
        %418 = vrot.lane.b32.xlu0 %v321, 16
        %v419 = vpop.permute.xlu0 %418
        %420 = vrot.lane.b32.xlu0 %v281, 16
        %v421 = vpop.permute.xlu0 %420
        %422 = vrot.lane.b32.xlu0 %v322, 16
        %v423 = vpop.permute.xlu0 %422
        %vm424 = vcmp.lt.s32.totalorder %v283, 16
        %v425 = vsel %vm424, %v421, %v423
        %v426 = vsel %vm424, %v419, %v421
        %v427 = vsel %vm424, %v417, %v419
        %v428 = vsel %vm424, %v415, %v417
        %v429 = vsel %vm424, %v413, %v415
        %v430 = vsel %vm424, %v411, %v413
        %v431 = vsel %vm424, %v409, %v411
        %v432 = vsel %vm424, %v423, %v409
        %v433 = vsel %vm352, 1, 0
        %v434 = vsel %vm353, 1, 0
        %v435 = vsel %vm354, 1, 0
        %v436 = vsel %vm355, 1, 0
        %v437 = vsel %vm356, 1, 0
        %v438 = vsel %vm357, 1, 0
        %v439 = vsel %vm358, 1, 0
        %v440 = vsel %vm359, 1, 0
        %v441 = vcvt.s32.f32 %v433
        %v442 = vcvt.s32.f32 %v434
        %v443 = vcvt.s32.f32 %v435
        %v444 = vcvt.s32.f32 %v436
        %v445 = vcvt.s32.f32 %v437
        %v446 = vcvt.s32.f32 %v438
        %v447 = vcvt.s32.f32 %v439
        %v448 = vcvt.s32.f32 %v440
        %v449 = vmul.f32 %v432, %v441
        %v450 = vmul.f32 %v431, %v442
        %v451 = vmul.f32 %v430, %v443
        %v452 = vmul.f32 %v429, %v444
        %v453 = vmul.f32 %v428, %v445
        %v454 = vmul.f32 %v427, %v446
        %v455 = vmul.f32 %v426, %v447
        %v456 = vmul.f32 %v425, %v448
        %v465 = vrot.slane %v449, 4
        %v466 = vrot.slane %v450, 4
        %v467 = vrot.slane %v451, 4
        %v468 = vrot.slane %v452, 4
        %v469 = vrot.slane %v453, 4
        %v470 = vrot.slane %v454, 4
        %v471 = vrot.slane %v455, 4
        %v472 = vrot.slane %v456, 4
        %481 = vst [vmem:[#allocation2] sm:$0xf0] %v465
        %482 = vst [vmem:[#allocation2 + $0x8] sm:$0xf0] %v466
        %483 = vst [vmem:[#allocation2 + $0x10] sm:$0xf0] %v467
        %484 = vst [vmem:[#allocation2 + $0x18] sm:$0xf0] %v468
        %485 = vst [vmem:[#allocation2 + $0x20] sm:$0xf0] %v469
        %486 = vst [vmem:[#allocation2 + $0x28] sm:$0xf0] %v470
        %487 = vst [vmem:[#allocation2 + $0x30] sm:$0xf0] %v471
        %488 = vst [vmem:[#allocation2 + $0x38] sm:$0xf0] %v472
        %489 = vrot.lane.b32.xlu0 %v278, 15
        %v490 = vpop.permute.xlu0 %489
        %491 = vrot.lane.b32.xlu0 %v319, 15
        %v492 = vpop.permute.xlu0 %491
        %493 = vrot.lane.b32.xlu0 %v279, 15
        %v494 = vpop.permute.xlu0 %493
        %495 = vrot.lane.b32.xlu0 %v320, 15
        %v496 = vpop.permute.xlu0 %495
        %497 = vrot.lane.b32.xlu0 %v280, 15
        %v498 = vpop.permute.xlu0 %497
        %499 = vrot.lane.b32.xlu0 %v321, 15
        %v500 = vpop.permute.xlu0 %499
        %501 = vrot.lane.b32.xlu0 %v281, 15
        %v502 = vpop.permute.xlu0 %501
        %503 = vrot.lane.b32.xlu0 %v322, 15
        %v504 = vpop.permute.xlu0 %503
        %vm505 = vcmp.lt.s32.totalorder %v283, 15
        %v506 = vsel %vm505, %v502, %v504
        %v507 = vsel %vm505, %v500, %v502
        %v508 = vsel %vm505, %v498, %v500
        %v509 = vsel %vm505, %v496, %v498
        %v510 = vsel %vm505, %v494, %v496
        %v511 = vsel %vm505, %v492, %v494
        %v512 = vsel %vm505, %v490, %v492
        %v513 = vsel %vm505, %v504, %v490
        %vm514 = vcmp.lt.s32.totalorder %v291, 15
        %vm515 = vcmp.lt.s32.totalorder %v292, 15
        %vm516 = vcmp.lt.s32.totalorder %v293, 15
        %vm517 = vcmp.lt.s32.totalorder %v294, 15
        %vm518 = vcmp.lt.s32.totalorder %v295, 15
        %vm519 = vcmp.lt.s32.totalorder %v296, 15
        %vm520 = vcmp.lt.s32.totalorder %v297, 15
        %vm521 = vcmp.lt.s32.totalorder %v298, 15
        %vm522 = vmand %vm352, %vm514
        %vm523 = vmand %vm353, %vm515
        %vm524 = vmand %vm354, %vm516
        %vm525 = vmand %vm355, %vm517
        %vm526 = vmand %vm356, %vm518
        %vm527 = vmand %vm357, %vm519
        %vm528 = vmand %vm358, %vm520
        %vm529 = vmand %vm359, %vm521
        %v530 = vsel %vm522, 1, 0
        %v531 = vsel %vm523, 1, 0
        %v532 = vsel %vm524, 1, 0
        %v533 = vsel %vm525, 1, 0
        %v534 = vsel %vm526, 1, 0
        %v535 = vsel %vm527, 1, 0
        %v536 = vsel %vm528, 1, 0
        %v537 = vsel %vm529, 1, 0
        %v538 = vcvt.s32.f32 %v530
        %v539 = vcvt.s32.f32 %v531
        %v540 = vcvt.s32.f32 %v532
        %v541 = vcvt.s32.f32 %v533
        %v542 = vcvt.s32.f32 %v534
        %v543 = vcvt.s32.f32 %v535
        %v544 = vcvt.s32.f32 %v536
        %v545 = vcvt.s32.f32 %v537
        %v546 = vmul.f32 %v513, %v538
        %v547 = vmul.f32 %v512, %v539
        %v548 = vmul.f32 %v511, %v540
        %v549 = vmul.f32 %v510, %v541
        %v550 = vmul.f32 %v509, %v542
        %v551 = vmul.f32 %v508, %v543
        %v552 = vmul.f32 %v507, %v544
        %v553 = vmul.f32 %v506, %v545
        %554 = vst [vmem:[#allocation2 + $0x40] sm:$0xf] %v546
        %555 = vst [vmem:[#allocation2 + $0x48] sm:$0xf] %v547
        %556 = vst [vmem:[#allocation2 + $0x50] sm:$0xf] %v548
        %557 = vst [vmem:[#allocation2 + $0x58] sm:$0xf] %v549
        %558 = vst [vmem:[#allocation2 + $0x60] sm:$0xf] %v550
        %559 = vst [vmem:[#allocation2 + $0x68] sm:$0xf] %v551
        %560 = vst [vmem:[#allocation2 + $0x70] sm:$0xf] %v552
        %561 = vst [vmem:[#allocation2 + $0x78] sm:$0xf] %v553
        %562 = vrot.lane.b32.xlu0 %v278, 1
        %v563 = vpop.permute.xlu0 %562
        %564 = vrot.lane.b32.xlu0 %v319, 1
        %v565 = vpop.permute.xlu0 %564
        %566 = vrot.lane.b32.xlu0 %v279, 1
        %v567 = vpop.permute.xlu0 %566
        %568 = vrot.lane.b32.xlu0 %v320, 1
        %v569 = vpop.permute.xlu0 %568
        %570 = vrot.lane.b32.xlu0 %v280, 1
        %v571 = vpop.permute.xlu0 %570
        %572 = vrot.lane.b32.xlu0 %v321, 1
        %v573 = vpop.permute.xlu0 %572
        %574 = vrot.lane.b32.xlu0 %v281, 1
        %v575 = vpop.permute.xlu0 %574
        %576 = vrot.lane.b32.xlu0 %v322, 1
        %v577 = vpop.permute.xlu0 %576
        %vm578 = vcmp.lt.s32.totalorder %v283, 1
        %v579 = vsel %vm578, %v575, %v577
        %v580 = vsel %vm578, %v573, %v575
        %v581 = vsel %vm578, %v571, %v573
        %v582 = vsel %vm578, %v569, %v571
        %v583 = vsel %vm578, %v567, %v569
        %v584 = vsel %vm578, %v565, %v567
        %v585 = vsel %vm578, %v563, %v565
        %v586 = vsel %vm578, %v577, %v563
        %v587 = vsel %vm360, 1, 0
        %v588 = vsel %vm361, 1, 0
        %v589 = vsel %vm362, 1, 0
        %v590 = vsel %vm363, 1, 0
        %v591 = vsel %vm364, 1, 0
        %v592 = vsel %vm365, 1, 0
        %v593 = vsel %vm366, 1, 0
        %v594 = vsel %vm367, 1, 0
        %v595 = vcvt.s32.f32 %v587
        %v596 = vcvt.s32.f32 %v588
        %v597 = vcvt.s32.f32 %v589
        %v598 = vcvt.s32.f32 %v590
        %v599 = vcvt.s32.f32 %v591
        %v600 = vcvt.s32.f32 %v592
        %v601 = vcvt.s32.f32 %v593
        %v602 = vcvt.s32.f32 %v594
        %v603 = vmul.f32 %v586, %v595
        %v604 = vmul.f32 %v585, %v596
        %v605 = vmul.f32 %v584, %v597
        %v606 = vmul.f32 %v583, %v598
        %v607 = vmul.f32 %v582, %v599
        %v608 = vmul.f32 %v581, %v600
        %v609 = vmul.f32 %v580, %v601
        %v610 = vmul.f32 %v579, %v602
        %v619 = vrot.slane %v603, 4
        %v620 = vrot.slane %v604, 4
        %v621 = vrot.slane %v605, 4
        %v622 = vrot.slane %v606, 4
        %v623 = vrot.slane %v607, 4
        %v624 = vrot.slane %v608, 4
        %v625 = vrot.slane %v609, 4
        %v626 = vrot.slane %v610, 4
        %635 = vst [vmem:[#allocation2 + $0x40] sm:$0xf0] %v619
        %636 = vst [vmem:[#allocation2 + $0x48] sm:$0xf0] %v620
        %637 = vst [vmem:[#allocation2 + $0x50] sm:$0xf0] %v621
        %638 = vst [vmem:[#allocation2 + $0x58] sm:$0xf0] %v622
        %639 = vst [vmem:[#allocation2 + $0x60] sm:$0xf0] %v623
        %640 = vst [vmem:[#allocation2 + $0x68] sm:$0xf0] %v624
        %641 = vst [vmem:[#allocation2 + $0x70] sm:$0xf0] %v625
        %642 = vst [vmem:[#allocation2 + $0x78] sm:$0xf0] %v626
        %643 = vst [vmem:[#allocation2 + $0x80] sm:$0xf] %v278
        %644 = vst [vmem:[#allocation2 + $0x88] sm:$0xf] %v319
        %645 = vst [vmem:[#allocation2 + $0x90] sm:$0xf] %v279
        %646 = vst [vmem:[#allocation2 + $0x98] sm:$0xf] %v320
        %647 = vst [vmem:[#allocation2 + $0xa0] sm:$0xf] %v280
        %648 = vst [vmem:[#allocation2 + $0xa8] sm:$0xf] %v321
        %649 = vst [vmem:[#allocation2 + $0xb0] sm:$0xf] %v281
        %650 = vst [vmem:[#allocation2 + $0xb8] sm:$0xf] %v322
        %651 = vrot.lane.b32.xlu0 %v278, 127
        %v652 = vpop.permute.xlu0 %651
        %653 = vrot.lane.b32.xlu0 %v319, 127
        %v654 = vpop.permute.xlu0 %653
        %655 = vrot.lane.b32.xlu0 %v279, 127
        %v656 = vpop.permute.xlu0 %655
        %657 = vrot.lane.b32.xlu0 %v320, 127
        %v658 = vpop.permute.xlu0 %657
        %659 = vrot.lane.b32.xlu0 %v280, 127
        %v660 = vpop.permute.xlu0 %659
        %661 = vrot.lane.b32.xlu0 %v321, 127
        %v662 = vpop.permute.xlu0 %661
        %663 = vrot.lane.b32.xlu0 %v281, 127
        %v664 = vpop.permute.xlu0 %663
        %665 = vrot.lane.b32.xlu0 %v322, 127
        %v666 = vpop.permute.xlu0 %665
        %vm667 = vcmp.lt.s32.totalorder %v283, 127
        %v668 = vsel %vm667, %v664, %v666
        %v669 = vsel %vm667, %v662, %v664
        %v670 = vsel %vm667, %v660, %v662
        %v671 = vsel %vm667, %v658, %v660
        %v672 = vsel %vm667, %v656, %v658
        %v673 = vsel %vm667, %v654, %v656
        %v674 = vsel %vm667, %v652, %v654
        %v675 = vsel %vm667, %v666, %v652
        %v676 = vsel %vm514, 1, 0
        %v677 = vsel %vm515, 1, 0
        %v678 = vsel %vm516, 1, 0
        %v679 = vsel %vm517, 1, 0
        %v680 = vsel %vm518, 1, 0
        %v681 = vsel %vm519, 1, 0
        %v682 = vsel %vm520, 1, 0
        %v683 = vsel %vm521, 1, 0
        %v684 = vcvt.s32.f32 %v676
        %v685 = vcvt.s32.f32 %v677
        %v686 = vcvt.s32.f32 %v678
        %v687 = vcvt.s32.f32 %v679
        %v688 = vcvt.s32.f32 %v680
        %v689 = vcvt.s32.f32 %v681
        %v690 = vcvt.s32.f32 %v682
        %v691 = vcvt.s32.f32 %v683
        %v692 = vmul.f32 %v674, %v684
        %v693 = vmul.f32 %v673, %v685
        %v694 = vmul.f32 %v672, %v686
        %v695 = vmul.f32 %v671, %v687
        %v696 = vmul.f32 %v670, %v688
        %v697 = vmul.f32 %v669, %v689
        %v698 = vmul.f32 %v668, %v690
        %v699 = vmul.f32 %v675, %v691
        %v708 = vrot.slane %v692, 4
        %v709 = vrot.slane %v693, 4
        %v710 = vrot.slane %v694, 4
        %v711 = vrot.slane %v695, 4
        %v712 = vrot.slane %v696, 4
        %v713 = vrot.slane %v697, 4
        %v714 = vrot.slane %v698, 4
        %v715 = vrot.slane %v699, 4
        %724 = vst [vmem:[#allocation2 + $0x80] sm:$0xf0] %v708
        %725 = vst [vmem:[#allocation2 + $0x88] sm:$0xf0] %v709
        %726 = vst [vmem:[#allocation2 + $0x90] sm:$0xf0] %v710
        %727 = vst [vmem:[#allocation2 + $0x98] sm:$0xf0] %v711
        %728 = vst [vmem:[#allocation2 + $0xa0] sm:$0xf0] %v712
        %729 = vst [vmem:[#allocation2 + $0xa8] sm:$0xf0] %v713
        %730 = vst [vmem:[#allocation2 + $0xb0] sm:$0xf0] %v714
        %731 = vst [vmem:[#allocation2 + $0xb8] sm:$0xf0] %v715
        %732 = vrot.lane.b32.xlu0 %v278, 113
        %v733 = vpop.permute.xlu0 %732
        %734 = vrot.lane.b32.xlu0 %v319, 113
        %v735 = vpop.permute.xlu0 %734
        %736 = vrot.lane.b32.xlu0 %v279, 113
        %v737 = vpop.permute.xlu0 %736
        %738 = vrot.lane.b32.xlu0 %v320, 113
        %v739 = vpop.permute.xlu0 %738
        %740 = vrot.lane.b32.xlu0 %v280, 113
        %v741 = vpop.permute.xlu0 %740
        %742 = vrot.lane.b32.xlu0 %v321, 113
        %v743 = vpop.permute.xlu0 %742
        %744 = vrot.lane.b32.xlu0 %v281, 113
        %v745 = vpop.permute.xlu0 %744
        %746 = vrot.lane.b32.xlu0 %v322, 113
        %v747 = vpop.permute.xlu0 %746
        %vm748 = vcmp.lt.s32.totalorder %v283, 113
        %v749 = vsel %vm748, %v745, %v747
        %v750 = vsel %vm748, %v743, %v745
        %v751 = vsel %vm748, %v741, %v743
        %v752 = vsel %vm748, %v739, %v741
        %v753 = vsel %vm748, %v737, %v739
        %v754 = vsel %vm748, %v735, %v737
        %v755 = vsel %vm748, %v733, %v735
        %v756 = vsel %vm748, %v747, %v733
        %vm757 = vcmp.lt.s32.totalorder %v307, 15
        %vm758 = vcmp.lt.s32.totalorder %v308, 15
        %vm759 = vcmp.lt.s32.totalorder %v309, 15
        %vm760 = vcmp.lt.s32.totalorder %v310, 15
        %vm761 = vcmp.lt.s32.totalorder %v311, 15
        %vm762 = vcmp.lt.s32.totalorder %v312, 15
        %vm763 = vcmp.lt.s32.totalorder %v313, 15
        %vm764 = vcmp.lt.s32.totalorder %v314, 15
        %vm765 = vmand %vm757, %vm360
        %vm766 = vmand %vm758, %vm361
        %vm767 = vmand %vm759, %vm362
        %vm768 = vmand %vm760, %vm363
        %vm769 = vmand %vm761, %vm364
        %vm770 = vmand %vm762, %vm365
        %vm771 = vmand %vm763, %vm366
        %vm772 = vmand %vm764, %vm367
        %v773 = vsel %vm765, 1, 0
        %v774 = vsel %vm766, 1, 0
        %v775 = vsel %vm767, 1, 0
        %v776 = vsel %vm768, 1, 0
        %v777 = vsel %vm769, 1, 0
        %v778 = vsel %vm770, 1, 0
        %v779 = vsel %vm771, 1, 0
        %v780 = vsel %vm772, 1, 0
        %v781 = vcvt.s32.f32 %v773
        %v782 = vcvt.s32.f32 %v774
        %v783 = vcvt.s32.f32 %v775
        %v784 = vcvt.s32.f32 %v776
        %v785 = vcvt.s32.f32 %v777
        %v786 = vcvt.s32.f32 %v778
        %v787 = vcvt.s32.f32 %v779
        %v788 = vcvt.s32.f32 %v780
        %v789 = vmul.f32 %v755, %v781
        %v790 = vmul.f32 %v754, %v782
        %v791 = vmul.f32 %v753, %v783
        %v792 = vmul.f32 %v752, %v784
        %v793 = vmul.f32 %v751, %v785
        %v794 = vmul.f32 %v750, %v786
        %v795 = vmul.f32 %v749, %v787
        %v796 = vmul.f32 %v756, %v788
        %797 = vst [vmem:[#allocation2 + $0xc0] sm:$0xf] %v789
        %798 = vst [vmem:[#allocation2 + $0xc8] sm:$0xf] %v790
        %799 = vst [vmem:[#allocation2 + $0xd0] sm:$0xf] %v791
        %800 = vst [vmem:[#allocation2 + $0xd8] sm:$0xf] %v792
        %801 = vst [vmem:[#allocation2 + $0xe0] sm:$0xf] %v793
        %802 = vst [vmem:[#allocation2 + $0xe8] sm:$0xf] %v794
        %803 = vst [vmem:[#allocation2 + $0xf0] sm:$0xf] %v795
        %804 = vst [vmem:[#allocation2 + $0xf8] sm:$0xf] %v796
        %805 = vrot.lane.b32.xlu0 %v278, 112
        %v806 = vpop.permute.xlu0 %805
        %807 = vrot.lane.b32.xlu0 %v319, 112
        %v808 = vpop.permute.xlu0 %807
        %809 = vrot.lane.b32.xlu0 %v279, 112
        %v810 = vpop.permute.xlu0 %809
        %811 = vrot.lane.b32.xlu0 %v320, 112
        %v812 = vpop.permute.xlu0 %811
        %813 = vrot.lane.b32.xlu0 %v280, 112
        %v814 = vpop.permute.xlu0 %813
        %815 = vrot.lane.b32.xlu0 %v321, 112
        %v816 = vpop.permute.xlu0 %815
        %817 = vrot.lane.b32.xlu0 %v281, 112
        %v818 = vpop.permute.xlu0 %817
        %819 = vrot.lane.b32.xlu0 %v322, 112
        %v820 = vpop.permute.xlu0 %819
        %vm821 = vcmp.lt.s32.totalorder %v283, 112
        %v822 = vsel %vm821, %v818, %v820
        %v823 = vsel %vm821, %v816, %v818
        %v824 = vsel %vm821, %v814, %v816
        %v825 = vsel %vm821, %v812, %v814
        %v826 = vsel %vm821, %v810, %v812
        %v827 = vsel %vm821, %v808, %v810
        %v828 = vsel %vm821, %v806, %v808
        %v829 = vsel %vm821, %v820, %v806
        %v830 = vsel %vm757, 1, 0
        %v831 = vsel %vm758, 1, 0
        %v832 = vsel %vm759, 1, 0
        %v833 = vsel %vm760, 1, 0
        %v834 = vsel %vm761, 1, 0
        %v835 = vsel %vm762, 1, 0
        %v836 = vsel %vm763, 1, 0
        %v837 = vsel %vm764, 1, 0
        %v838 = vcvt.s32.f32 %v830
        %v839 = vcvt.s32.f32 %v831
        %v840 = vcvt.s32.f32 %v832
        %v841 = vcvt.s32.f32 %v833
        %v842 = vcvt.s32.f32 %v834
        %v843 = vcvt.s32.f32 %v835
        %v844 = vcvt.s32.f32 %v836
        %v845 = vcvt.s32.f32 %v837
        %v846 = vmul.f32 %v828, %v838
        %v847 = vmul.f32 %v827, %v839
        %v848 = vmul.f32 %v826, %v840
        %v849 = vmul.f32 %v825, %v841
        %v850 = vmul.f32 %v824, %v842
        %v851 = vmul.f32 %v823, %v843
        %v852 = vmul.f32 %v822, %v844
        %v853 = vmul.f32 %v829, %v845
        %v862 = vrot.slane %v846, 4
        %v863 = vrot.slane %v847, 4
        %v864 = vrot.slane %v848, 4
        %v865 = vrot.slane %v849, 4
        %v866 = vrot.slane %v850, 4
        %v867 = vrot.slane %v851, 4
        %v868 = vrot.slane %v852, 4
        %v869 = vrot.slane %v853, 4
        %878 = vst [vmem:[#allocation2 + $0xc0] sm:$0xf0] %v862
        %879 = vst [vmem:[#allocation2 + $0xc8] sm:$0xf0] %v863
        %880 = vst [vmem:[#allocation2 + $0xd0] sm:$0xf0] %v864
        %881 = vst [vmem:[#allocation2 + $0xd8] sm:$0xf0] %v865
        %882 = vst [vmem:[#allocation2 + $0xe0] sm:$0xf0] %v866
        %883 = vst [vmem:[#allocation2 + $0xe8] sm:$0xf0] %v867
        %884 = vst [vmem:[#allocation2 + $0xf0] sm:$0xf0] %v868
        %885 = vst [vmem:[#allocation2 + $0xf8] sm:$0xf0] %v869
        %886 = vrot.lane.b32.xlu0 %v278, 111
        %v887 = vpop.permute.xlu0 %886
        %888 = vrot.lane.b32.xlu0 %v319, 111
        %v889 = vpop.permute.xlu0 %888
        %890 = vrot.lane.b32.xlu0 %v279, 111
        %v891 = vpop.permute.xlu0 %890
        %892 = vrot.lane.b32.xlu0 %v320, 111
        %v893 = vpop.permute.xlu0 %892
        %894 = vrot.lane.b32.xlu0 %v280, 111
        %v895 = vpop.permute.xlu0 %894
        %896 = vrot.lane.b32.xlu0 %v321, 111
        %v897 = vpop.permute.xlu0 %896
        %898 = vrot.lane.b32.xlu0 %v281, 111
        %v899 = vpop.permute.xlu0 %898
        %900 = vrot.lane.b32.xlu0 %v322, 111
        %v901 = vpop.permute.xlu0 %900
        %vm902 = vcmp.lt.s32.totalorder %v283, 111
        %v903 = vsel %vm902, %v899, %v901
        %v904 = vsel %vm902, %v897, %v899
        %v905 = vsel %vm902, %v895, %v897
        %v906 = vsel %vm902, %v893, %v895
        %v907 = vsel %vm902, %v891, %v893
        %v908 = vsel %vm902, %v889, %v891
        %v909 = vsel %vm902, %v887, %v889
        %v910 = vsel %vm902, %v901, %v887
        %vm911 = vmand %vm757, %vm514
        %vm912 = vmand %vm758, %vm515
        %vm913 = vmand %vm759, %vm516
        %vm914 = vmand %vm760, %vm517
        %vm915 = vmand %vm761, %vm518
        %vm916 = vmand %vm762, %vm519
        %vm917 = vmand %vm763, %vm520
        %vm918 = vmand %vm764, %vm521
        %v919 = vsel %vm911, 1, 0
        %v920 = vsel %vm912, 1, 0
        %v921 = vsel %vm913, 1, 0
        %v922 = vsel %vm914, 1, 0
        %v923 = vsel %vm915, 1, 0
        %v924 = vsel %vm916, 1, 0
        %v925 = vsel %vm917, 1, 0
        %v926 = vsel %vm918, 1, 0
        %v927 = vcvt.s32.f32 %v919
        %v928 = vcvt.s32.f32 %v920
        %v929 = vcvt.s32.f32 %v921
        %v930 = vcvt.s32.f32 %v922
        %v931 = vcvt.s32.f32 %v923
        %v932 = vcvt.s32.f32 %v924
        %v933 = vcvt.s32.f32 %v925
        %v934 = vcvt.s32.f32 %v926
        %v935 = vmul.f32 %v909, %v927
        %v936 = vmul.f32 %v908, %v928
        %v937 = vmul.f32 %v907, %v929
        %v938 = vmul.f32 %v906, %v930
        %v939 = vmul.f32 %v905, %v931
        %v940 = vmul.f32 %v904, %v932
        %v941 = vmul.f32 %v903, %v933
        %v942 = vmul.f32 %v910, %v934
        %943 = vst [vmem:[#allocation2 + $0x100] sm:$0xf] %v935
        %944 = vst [vmem:[#allocation2 + $0x108] sm:$0xf] %v936
        %945 = vst [vmem:[#allocation2 + $0x110] sm:$0xf] %v937
        %946 = vst [vmem:[#allocation2 + $0x118] sm:$0xf] %v938
        %947 = vst [vmem:[#allocation2 + $0x120] sm:$0xf] %v939
        %948 = vst [vmem:[#allocation2 + $0x128] sm:$0xf] %v940
        %949 = vst [vmem:[#allocation2 + $0x130] sm:$0xf] %v941
        %950 = vst [vmem:[#allocation2 + $0x138] sm:$0xf] %v942
        %v951 = vld [vmem:[%s4] sm:$0xff]
        %v952 = vld [vmem:[%s4 + $0x8] sm:$0xff]
        %v953 = vld [vmem:[%s4] sm:$0xf]
        %v954 = vld [vmem:[%s1] sm:$0xf]
        %v955 = vld [vmem:[%s1 + $0x4] sm:$0xf]
        %v956 = vld [vmem:[#allocation2] sm:$0xff]
        %v957 = vld [vmem:[#allocation2 + $0x8] sm:$0xff]
        %v958 = vld [vmem:[#allocation2 + $0x10] sm:$0xff]
        %v959 = vld [vmem:[#allocation2 + $0x18] sm:$0xff]
        %v960 = vld [vmem:[#allocation2 + $0x20] sm:$0xff]
        %v961 = vld [vmem:[#allocation2 + $0x28] sm:$0xff]
        %v962 = vld [vmem:[#allocation2 + $0x30] sm:$0xff]
        %v963 = vld [vmem:[#allocation2 + $0x38] sm:$0xff]
        %v964 = vld [vmem:[#allocation2 + $0x40] sm:$0xff]
        %v965 = vld [vmem:[#allocation2 + $0x48] sm:$0xff]
        %v966 = vld [vmem:[#allocation2 + $0x50] sm:$0xff]
        %v967 = vld [vmem:[#allocation2 + $0x58] sm:$0xff]
        %v968 = vld [vmem:[#allocation2 + $0x60] sm:$0xff]
        %v969 = vld [vmem:[#allocation2 + $0x68] sm:$0xff]
        %v970 = vld [vmem:[#allocation2 + $0x70] sm:$0xff]
        %v971 = vld [vmem:[#allocation2 + $0x78] sm:$0xff]
        %v972 = vld [vmem:[#allocation2 + $0x80] sm:$0xff]
        %v973 = vld [vmem:[#allocation2 + $0x88] sm:$0xff]
        %v974 = vld [vmem:[#allocation2 + $0x90] sm:$0xff]
        %v975 = vld [vmem:[#allocation2 + $0x98] sm:$0xff]
        %v976 = vld [vmem:[#allocation2 + $0xa0] sm:$0xff]
        %v977 = vld [vmem:[#allocation2 + $0xa8] sm:$0xff]
        %v978 = vld [vmem:[#allocation2 + $0xb0] sm:$0xff]
        %v979 = vld [vmem:[#allocation2 + $0xb8] sm:$0xff]
        %v980 = vld [vmem:[#allocation2 + $0xc0] sm:$0xff]
        %v981 = vld [vmem:[#allocation2 + $0xc8] sm:$0xff]
        %v982 = vld [vmem:[#allocation2 + $0xd0] sm:$0xff]
        %v983 = vld [vmem:[#allocation2 + $0xd8] sm:$0xff]
        %v984 = vld [vmem:[#allocation2 + $0xe0] sm:$0xff]
        %v985 = vld [vmem:[#allocation2 + $0xe8] sm:$0xff]
        %v986 = vld [vmem:[#allocation2 + $0xf0] sm:$0xff]
        %v987 = vld [vmem:[#allocation2 + $0xf8] sm:$0xff]
        %v988 = vld [vmem:[#allocation2 + $0x100] sm:$0xf]
        %v989 = vld [vmem:[#allocation2 + $0x108] sm:$0xf]
        %v990 = vld [vmem:[#allocation2 + $0x110] sm:$0xf]
        %v991 = vld [vmem:[#allocation2 + $0x118] sm:$0xf]
        %v992 = vld [vmem:[#allocation2 + $0x120] sm:$0xf]
        %v993 = vld [vmem:[#allocation2 + $0x128] sm:$0xf]
        %v994 = vld [vmem:[#allocation2 + $0x130] sm:$0xf]
        %v995 = vld [vmem:[#allocation2 + $0x138] sm:$0xf]
        %v996 = vpack.c.bf16 %v964, %v956
        %v997 = vpack.c.bf16 %v965, %v957
        %v998 = vpack.c.bf16 %v966, %v958
        %v999 = vpack.c.bf16 %v967, %v959
        %v1000 = vpack.c.bf16 %v968, %v960
        %v1001 = vpack.c.bf16 %v969, %v961
        %v1002 = vpack.c.bf16 %v970, %v962
        %v1003 = vpack.c.bf16 %v971, %v963
        %v1004 = vpack.c.bf16 %v980, %v972
        %v1005 = vpack.c.bf16 %v981, %v973
        %v1006 = vpack.c.bf16 %v982, %v974
        %v1007 = vpack.c.bf16 %v983, %v975
        %v1008 = vpack.c.bf16 %v984, %v976
        %v1009 = vpack.c.bf16 %v985, %v977
        %v1010 = vpack.c.bf16 %v986, %v978
        %v1011 = vpack.c.bf16 %v987, %v979
        %v1012 = vpack.c.bf16 %v988, %v988
        %v1013 = vpack.c.bf16 %v989, %v989
        %v1014 = vpack.c.bf16 %v990, %v990
        %v1015 = vpack.c.bf16 %v991, %v991
        %v1016 = vpack.c.bf16 %v992, %v992
        %v1017 = vpack.c.bf16 %v993, %v993
        %v1018 = vpack.c.bf16 %v994, %v994
        %v1019 = vpack.c.bf16 %v995, %v995
        %1021 = vset.pattern.permute.xlu0 0
        %1022 = vperm.xlu0 %1021, %v951
        %v1023 = vpop.permute.xlu0 %1022
        %1026 = vset.pattern.permute.xlu0 0
        %1027 = vperm.xlu0 %1026, %v952
        %v1028 = vpop.permute.xlu0 %1027
        %v1032 = vunpack.c.l.b16 %v954
        %v1033 = vunpack.c.l.b16 %v955
        %v1034 = vpack.c.b16 %v1033, %v1032
        %vm1035 = vcmask 293888
        %v1037 = vsel %vm1035, %v1034, 0
        %vm1039 = vcmask 1041408
        %v1041 = vsel %vm1039, %v1012, 0
        %v1044 = vsel %vm1039, %v1013, 0
        %v1047 = vsel %vm1039, %v1014, 0
        %v1050 = vsel %vm1039, %v1015, 0
        %v1053 = vsel %vm1039, %v1016, 0
        %v1056 = vsel %vm1039, %v1017, 0
        %v1059 = vsel %vm1039, %v1018, 0
        %v1062 = vsel %vm1039, %v1019, 0
        %1064 = vmatprep.subr.bf16.mxu0 %v997
        %1065 = vmatpush1.bf16.msra.mxu0 %v996
        %1066 = vmatprep.subr.bf16.mxu0 %v1005
        %1067 = vmatpush1.bf16.msra.mxu0 %v1004
        %1068 = vmatprep.subr.bf16.mxu0 %v1044
        %1069 = vmatpush1.bf16.msra.mxu0 %v1041
        %1070 = vmatprep.subr.bf16.mxu0 0
        %1071 = vmatpush1.bf16.msra.mxu0 0
        %1072 = vmatprep.subr.bf16.mxu0 0
        %1073 = vmatpush1.bf16.msra.mxu0 0
        %1074 = vmatprep.subr.bf16.mxu0 0
        %1075 = vmatpush1.bf16.msra.mxu0 0
        %1076 = vmatprep.subr.bf16.mxu0 0
        %1077 = vmatpush1.bf16.msra.mxu0 0
        %1078 = vmatprep.subr.bf16.mxu0 0
        %1079 = vmatpush1.bf16.msra.mxu0 0
        %1080 = vmatprep.subr.bf16.mxu0 0
        %1081 = vmatpush1.bf16.msra.mxu0 0
        %1082 = vmatprep.subr.bf16.mxu0 0
        %1083 = vmatpush1.bf16.msra.mxu0 0
        %1084 = vmatprep.subr.bf16.mxu0 0
        %1085 = vmatpush1.bf16.msra.mxu0 0
        %1086 = vmatprep.subr.bf16.mxu0 0
        %1087 = vmatpush1.bf16.msra.mxu0 0
        %1088 = vmatprep.subr.bf16.mxu0 0
        %1089 = vmatpush1.bf16.msra.mxu0 0
        %1090 = vmatprep.subr.bf16.mxu0 0
        %1091 = vmatpush1.bf16.msra.mxu0 0
        %1092 = vmatprep.subr.bf16.mxu0 0
        %1093 = vmatpush1.bf16.msra.mxu0 0
        %1094 = vmatprep.subr.bf16.mxu0 0
        %1095 = vmatpush1.bf16.msra.mxu0 0
        %1096 = vmatprep.mubr.bf16.mxu0 0
        %1097 = vmatmul.mubr.bf16.gmra.mrb[0].mxu0 %v1037
        %v1098 = vpop.f32.mrb[0].mxu0
        %v1099 = vadd.f32 %v1023, %v1098
        %v1100 = vpop.f32.mrb[0].mxu0
        %v1101 = vadd.f32 %v1023, %v1100
        %v1102 = vpop.f32.mrb[0].mxu0
        %v1103 = vadd.f32 %v1028, %v1102
        %v1104 = vpop.f32.mrb[0].mxu0
        %v1105 = vadd.f32 %v1028, %v1104
        %1106 = vdwg.mxu0
        %1107 = vmatprep.subr.bf16.mxu0 %v999
        %1108 = vmatpush1.bf16.msra.mxu0 %v998
        %1109 = vmatprep.subr.bf16.mxu0 %v1007
        %1110 = vmatpush1.bf16.msra.mxu0 %v1006
        %1111 = vmatprep.subr.bf16.mxu0 %v1050
        %1112 = vmatpush1.bf16.msra.mxu0 %v1047
        %1113 = vmatprep.subr.bf16.mxu0 0
        %1114 = vmatpush1.bf16.msra.mxu0 0
        %1115 = vmatprep.subr.bf16.mxu0 0
        %1116 = vmatpush1.bf16.msra.mxu0 0
        %1117 = vmatprep.subr.bf16.mxu0 0
        %1118 = vmatpush1.bf16.msra.mxu0 0
        %1119 = vmatprep.subr.bf16.mxu0 0
        %1120 = vmatpush1.bf16.msra.mxu0 0
        %1121 = vmatprep.subr.bf16.mxu0 0
        %1122 = vmatpush1.bf16.msra.mxu0 0
        %1123 = vmatprep.subr.bf16.mxu0 0
        %1124 = vmatpush1.bf16.msra.mxu0 0
        %1125 = vmatprep.subr.bf16.mxu0 0
        %1126 = vmatpush1.bf16.msra.mxu0 0
        %1127 = vmatprep.subr.bf16.mxu0 0
        %1128 = vmatpush1.bf16.msra.mxu0 0
        %1129 = vmatprep.subr.bf16.mxu0 0
        %1130 = vmatpush1.bf16.msra.mxu0 0
        %1131 = vmatprep.subr.bf16.mxu0 0
        %1132 = vmatpush1.bf16.msra.mxu0 0
        %1133 = vmatprep.subr.bf16.mxu0 0
        %1134 = vmatpush1.bf16.msra.mxu0 0
        %1135 = vmatprep.subr.bf16.mxu0 0
        %1136 = vmatpush1.bf16.msra.mxu0 0
        %1137 = vmatprep.subr.bf16.mxu0 0
        %1138 = vmatpush1.bf16.msra.mxu0 0
        %1139 = vmatprep.mubr.bf16.mxu0 0
        %1140 = vmatmul.mubr.bf16.gmra.mrb[0].mxu0 %v1037
        %v1141 = vpop.f32.mrb[0].mxu0
        %v1142 = vadd.f32 %v1023, %v1141
        %v1143 = vpop.f32.mrb[0].mxu0
        %v1144 = vadd.f32 %v1023, %v1143
        %v1145 = vpop.f32.mrb[0].mxu0
        %v1146 = vadd.f32 %v1028, %v1145
        %v1147 = vpop.f32.mrb[0].mxu0
        %v1148 = vadd.f32 %v1028, %v1147
        %1149 = vdwg.mxu0
        %1150 = vmatprep.subr.bf16.mxu0 %v1001
        %1151 = vmatpush1.bf16.msra.mxu0 %v1000
        %1152 = vmatprep.subr.bf16.mxu0 %v1009
        %1153 = vmatpush1.bf16.msra.mxu0 %v1008
        %1154 = vmatprep.subr.bf16.mxu0 %v1056
        %1155 = vmatpush1.bf16.msra.mxu0 %v1053
        %1156 = vmatprep.subr.bf16.mxu0 0
        %1157 = vmatpush1.bf16.msra.mxu0 0
        %1158 = vmatprep.subr.bf16.mxu0 0
        %1159 = vmatpush1.bf16.msra.mxu0 0
        %1160 = vmatprep.subr.bf16.mxu0 0
        %1161 = vmatpush1.bf16.msra.mxu0 0
        %1162 = vmatprep.subr.bf16.mxu0 0
        %1163 = vmatpush1.bf16.msra.mxu0 0
        %1164 = vmatprep.subr.bf16.mxu0 0
        %1165 = vmatpush1.bf16.msra.mxu0 0
        %1166 = vmatprep.subr.bf16.mxu0 0
        %1167 = vmatpush1.bf16.msra.mxu0 0
        %1168 = vmatprep.subr.bf16.mxu0 0
        %1169 = vmatpush1.bf16.msra.mxu0 0
        %1170 = vmatprep.subr.bf16.mxu0 0
        %1171 = vmatpush1.bf16.msra.mxu0 0
        %1172 = vmatprep.subr.bf16.mxu0 0
        %1173 = vmatpush1.bf16.msra.mxu0 0
        %1174 = vmatprep.subr.bf16.mxu0 0
        %1175 = vmatpush1.bf16.msra.mxu0 0
        %1176 = vmatprep.subr.bf16.mxu0 0
        %1177 = vmatpush1.bf16.msra.mxu0 0
        %1178 = vmatprep.subr.bf16.mxu0 0
        %1179 = vmatpush1.bf16.msra.mxu0 0
        %1180 = vmatprep.subr.bf16.mxu0 0
        %1181 = vmatpush1.bf16.msra.mxu0 0
        %1182 = vmatprep.mubr.bf16.mxu0 0
        %1183 = vmatmul.mubr.bf16.gmra.mrb[0].mxu0 %v1037
        %v1184 = vpop.f32.mrb[0].mxu0
        %v1185 = vadd.f32 %v1023, %v1184
        %v1186 = vpop.f32.mrb[0].mxu0
        %v1187 = vadd.f32 %v1023, %v1186
        %v1188 = vpop.f32.mrb[0].mxu0
        %v1189 = vadd.f32 %v1028, %v1188
        %v1190 = vpop.f32.mrb[0].mxu0
        %v1191 = vadd.f32 %v1028, %v1190
        %1192 = vdwg.mxu0
        %1193 = vmatprep.subr.bf16.mxu0 %v1003
        %1194 = vmatpush1.bf16.msra.mxu0 %v1002
        %1195 = vmatprep.subr.bf16.mxu0 %v1011
        %1196 = vmatpush1.bf16.msra.mxu0 %v1010
        %1197 = vmatprep.subr.bf16.mxu0 %v1062
        %1198 = vmatpush1.bf16.msra.mxu0 %v1059
        %1199 = vmatprep.subr.bf16.mxu0 0
        %1200 = vmatpush1.bf16.msra.mxu0 0
        %1201 = vmatprep.subr.bf16.mxu0 0
        %1202 = vmatpush1.bf16.msra.mxu0 0
        %1203 = vmatprep.subr.bf16.mxu0 0
        %1204 = vmatpush1.bf16.msra.mxu0 0
        %1205 = vmatprep.subr.bf16.mxu0 0
        %1206 = vmatpush1.bf16.msra.mxu0 0
        %1207 = vmatprep.subr.bf16.mxu0 0
        %1208 = vmatpush1.bf16.msra.mxu0 0
        %1209 = vmatprep.subr.bf16.mxu0 0
        %1210 = vmatpush1.bf16.msra.mxu0 0
        %1211 = vmatprep.subr.bf16.mxu0 0
        %1212 = vmatpush1.bf16.msra.mxu0 0
        %1213 = vmatprep.subr.bf16.mxu0 0
        %1214 = vmatpush1.bf16.msra.mxu0 0
        %1215 = vmatprep.subr.bf16.mxu0 0
        %1216 = vmatpush1.bf16.msra.mxu0 0
        %1217 = vmatprep.subr.bf16.mxu0 0
        %1218 = vmatpush1.bf16.msra.mxu0 0
        %1219 = vmatprep.subr.bf16.mxu0 0
        %1220 = vmatpush1.bf16.msra.mxu0 0
        %1221 = vmatprep.subr.bf16.mxu0 0
        %1222 = vmatpush1.bf16.msra.mxu0 0
        %1223 = vmatprep.subr.bf16.mxu0 0
        %1224 = vmatpush1.bf16.msra.mxu0 0
        %1225 = vmatprep.mubr.bf16.mxu0 0
        %1226 = vmatmul.mubr.bf16.gmra.mrb[0].mxu0 %v1037
        %v1227 = vpop.f32.mrb[0].mxu0
        %v1228 = vadd.f32 %v1023, %v1227
        %v1229 = vpop.f32.mrb[0].mxu0
        %v1230 = vadd.f32 %v1023, %v1229
        %v1231 = vpop.f32.mrb[0].mxu0
        %v1232 = vadd.f32 %v1028, %v1231
        %v1233 = vpop.f32.mrb[0].mxu0
        %v1234 = vadd.f32 %v1028, %v1233
        %1235 = vdwg.mxu0
        %v1236 = vmax.f32 %v1099, 0.0
        %v1237 = vmax.f32 %v1101, 0.0
        %v1238 = vmax.f32 %v1142, 0.0
        %v1239 = vmax.f32 %v1144, 0.0
        %v1240 = vmax.f32 %v1185, 0.0
        %v1241 = vmax.f32 %v1187, 0.0
        %v1242 = vmax.f32 %v1228, 0.0
        %v1243 = vmax.f32 %v1230, 0.0
        %v1244 = vmax.f32 %v1103, 0.0
        %v1245 = vmax.f32 %v1105, 0.0
        %v1246 = vmax.f32 %v1146, 0.0
        %v1247 = vmax.f32 %v1148, 0.0
        %v1248 = vmax.f32 %v1189, 0.0
        %v1249 = vmax.f32 %v1191, 0.0
        %v1250 = vmax.f32 %v1232, 0.0
        %v1251 = vmax.f32 %v1234, 0.0
        %v1252 = vld [vmem:[%s5] sm:$0xff]
        %v1253 = vld [vmem:[%s5 + $0x8] sm:$0xff]
        %v1254 = vld [vmem:[%s5 + $0x10] sm:$0xff]
        %v1255 = vld [vmem:[%s5 + $0x18] sm:$0xff]
        %v1256 = vld [vmem:[%s5 + $0x20] sm:$0xff]
        %v1257 = vld [vmem:[%s5 + $0x28] sm:$0xff]
        %v1258 = vld [vmem:[%s5 + $0x30] sm:$0xff]
        %v1259 = vld [vmem:[%s5 + $0x38] sm:$0xff]
        %v1260 = vld [vmem:[%s5 + $0x40] sm:$0xff]
        %v1261 = vld [vmem:[%s5 + $0x48] sm:$0xff]
        %v1262 = vld [vmem:[%s5 + $0x50] sm:$0xff]
        %v1263 = vld [vmem:[%s5 + $0x58] sm:$0xff]
        %v1264 = vld [vmem:[%s5 + $0x60] sm:$0xff]
        %v1265 = vld [vmem:[%s5 + $0x68] sm:$0xff]
        %v1266 = vld [vmem:[%s5 + $0x70] sm:$0xff]
        %v1267 = vld [vmem:[%s5 + $0x78] sm:$0xff]
        %v1268 = vld [vmem:[%s5 + $0x80] sm:$0xff]
        %v1269 = vld [vmem:[%s5 + $0x88] sm:$0xff]
        %v1270 = vld [vmem:[%s5 + $0x90] sm:$0xff]
        %v1271 = vld [vmem:[%s5 + $0x98] sm:$0xff]
        %v1272 = vld [vmem:[%s5 + $0xa0] sm:$0xff]
        %v1273 = vld [vmem:[%s5 + $0xa8] sm:$0xff]
        %v1274 = vld [vmem:[%s5 + $0xb0] sm:$0xff]
        %v1275 = vld [vmem:[%s5 + $0xb8] sm:$0xff]
        %v1276 = vld [vmem:[%s5 + $0xc0] sm:$0xff]
        %v1277 = vld [vmem:[%s5 + $0xc8] sm:$0xff]
        %v1278 = vld [vmem:[%s5 + $0xd0] sm:$0xff]
        %v1279 = vld [vmem:[%s5 + $0xd8] sm:$0xff]
        %v1280 = vld [vmem:[%s5 + $0xe0] sm:$0xff]
        %v1281 = vld [vmem:[%s5 + $0xe8] sm:$0xff]
        %v1282 = vld [vmem:[%s5 + $0xf0] sm:$0xff]
        %v1283 = vld [vmem:[%s5 + $0xf8] sm:$0xff]
        %v1284 = vld [vmem:[%s5 + $0x100] sm:$0xff]
        %v1285 = vld [vmem:[%s5 + $0x108] sm:$0xff]
        %v1286 = vld [vmem:[%s5 + $0x110] sm:$0xff]
        %v1287 = vld [vmem:[%s5 + $0x118] sm:$0xff]
        %v1288 = vld [vmem:[%s5 + $0x120] sm:$0xff]
        %v1289 = vld [vmem:[%s5 + $0x128] sm:$0xff]
        %v1290 = vld [vmem:[%s5 + $0x130] sm:$0xff]
        %v1291 = vld [vmem:[%s5 + $0x138] sm:$0xff]
        %v1292 = vld [vmem:[%s5 + $0x140] sm:$0xff]
        %v1293 = vld [vmem:[%s5 + $0x148] sm:$0xff]
        %v1294 = vld [vmem:[%s5 + $0x150] sm:$0xff]
        %v1295 = vld [vmem:[%s5 + $0x158] sm:$0xff]
        %v1296 = vld [vmem:[%s5 + $0x160] sm:$0xff]
        %v1297 = vld [vmem:[%s5 + $0x168] sm:$0xff]
        %v1298 = vld [vmem:[%s5 + $0x170] sm:$0xff]
        %v1299 = vld [vmem:[%s5 + $0x178] sm:$0xff]
        %v1300 = vld [vmem:[%s5 + $0x180] sm:$0xff]
        %v1301 = vld [vmem:[%s5 + $0x188] sm:$0xff]
        %v1302 = vld [vmem:[%s5 + $0x190] sm:$0xff]
        %v1303 = vld [vmem:[%s5 + $0x198] sm:$0xff]
        %v1304 = vld [vmem:[%s5 + $0x1a0] sm:$0xff]
        %v1305 = vld [vmem:[%s5 + $0x1a8] sm:$0xff]
        %v1306 = vld [vmem:[%s5 + $0x1b0] sm:$0xff]
        %v1307 = vld [vmem:[%s5 + $0x1b8] sm:$0xff]
        %v1308 = vld [vmem:[%s5 + $0x1c0] sm:$0xff]
        %v1309 = vld [vmem:[%s5 + $0x1c8] sm:$0xff]
        %v1310 = vld [vmem:[%s5 + $0x1d0] sm:$0xff]
        %v1311 = vld [vmem:[%s5 + $0x1d8] sm:$0xff]
        %v1312 = vld [vmem:[%s5 + $0x1e0] sm:$0xff]
        %v1313 = vld [vmem:[%s5 + $0x1e8] sm:$0xff]
        %v1314 = vld [vmem:[%s5 + $0x1f0] sm:$0xff]
        %v1315 = vld [vmem:[%s5 + $0x1f8] sm:$0xff]
        %v1316 = vld [vmem:[%s5 + $0x200] sm:$0xff]
        %v1317 = vld [vmem:[%s5 + $0x208] sm:$0xff]
        %v1318 = vld [vmem:[%s5 + $0x210] sm:$0xff]
        %v1319 = vld [vmem:[%s5 + $0x218] sm:$0xff]
        %v1320 = vld [vmem:[%s5 + $0x220] sm:$0xff]
        %v1321 = vld [vmem:[%s5 + $0x228] sm:$0xff]
        %v1322 = vld [vmem:[%s5 + $0x230] sm:$0xff]
        %v1323 = vld [vmem:[%s5 + $0x238] sm:$0xff]
        %v1324 = vld [vmem:[%s5 + $0x240] sm:$0xff]
        %v1325 = vld [vmem:[%s5 + $0x248] sm:$0xff]
        %v1326 = vld [vmem:[%s5 + $0x250] sm:$0xff]
        %v1327 = vld [vmem:[%s5 + $0x258] sm:$0xff]
        %v1328 = vld [vmem:[%s5 + $0x260] sm:$0xff]
        %v1329 = vld [vmem:[%s5 + $0x268] sm:$0xff]
        %v1330 = vld [vmem:[%s5 + $0x270] sm:$0xff]
        %v1331 = vld [vmem:[%s5 + $0x278] sm:$0xff]
        %v1332 = vld [vmem:[%s5 + $0x280] sm:$0xff]
        %v1333 = vld [vmem:[%s5 + $0x288] sm:$0xff]
        %v1334 = vld [vmem:[%s5 + $0x290] sm:$0xff]
        %v1335 = vld [vmem:[%s5 + $0x298] sm:$0xff]
        %v1336 = vld [vmem:[%s5 + $0x2a0] sm:$0xff]
        %v1337 = vld [vmem:[%s5 + $0x2a8] sm:$0xff]
        %v1338 = vld [vmem:[%s5 + $0x2b0] sm:$0xff]
        %v1339 = vld [vmem:[%s5 + $0x2b8] sm:$0xff]
        %v1340 = vld [vmem:[%s5 + $0x2c0] sm:$0xff]
        %v1341 = vld [vmem:[%s5 + $0x2c8] sm:$0xff]
        %v1342 = vld [vmem:[%s5 + $0x2d0] sm:$0xff]
        %v1343 = vld [vmem:[%s5 + $0x2d8] sm:$0xff]
        %v1344 = vld [vmem:[%s5 + $0x2e0] sm:$0xff]
        %v1345 = vld [vmem:[%s5 + $0x2e8] sm:$0xff]
        %v1346 = vld [vmem:[%s5 + $0x2f0] sm:$0xff]
        %v1347 = vld [vmem:[%s5 + $0x2f8] sm:$0xff]
        %v1348 = vld [vmem:[%s5 + $0x300] sm:$0xff]
        %v1349 = vld [vmem:[%s5 + $0x308] sm:$0xff]
        %v1350 = vld [vmem:[%s5 + $0x310] sm:$0xff]
        %v1351 = vld [vmem:[%s5 + $0x318] sm:$0xff]
        %v1352 = vld [vmem:[%s5 + $0x320] sm:$0xff]
        %v1353 = vld [vmem:[%s5 + $0x328] sm:$0xff]
        %v1354 = vld [vmem:[%s5 + $0x330] sm:$0xff]
        %v1355 = vld [vmem:[%s5 + $0x338] sm:$0xff]
        %v1356 = vld [vmem:[%s5 + $0x340] sm:$0xff]
        %v1357 = vld [vmem:[%s5 + $0x348] sm:$0xff]
        %v1358 = vld [vmem:[%s5 + $0x350] sm:$0xff]
        %v1359 = vld [vmem:[%s5 + $0x358] sm:$0xff]
        %v1360 = vld [vmem:[%s5 + $0x360] sm:$0xff]
        %v1361 = vld [vmem:[%s5 + $0x368] sm:$0xff]
        %v1362 = vld [vmem:[%s5 + $0x370] sm:$0xff]
        %v1363 = vld [vmem:[%s5 + $0x378] sm:$0xff]
        %v1364 = vld [vmem:[%s5 + $0x380] sm:$0xff]
        %v1365 = vld [vmem:[%s5 + $0x388] sm:$0xff]
        %v1366 = vld [vmem:[%s5 + $0x390] sm:$0xff]
        %v1367 = vld [vmem:[%s5 + $0x398] sm:$0xff]
        %v1368 = vld [vmem:[%s5 + $0x3a0] sm:$0xff]
        %v1369 = vld [vmem:[%s5 + $0x3a8] sm:$0xff]
        %v1370 = vld [vmem:[%s5 + $0x3b0] sm:$0xff]
        %v1371 = vld [vmem:[%s5 + $0x3b8] sm:$0xff]
        %v1372 = vld [vmem:[%s5 + $0x3c0] sm:$0xff]
        %v1373 = vld [vmem:[%s5 + $0x3c8] sm:$0xff]
        %v1374 = vld [vmem:[%s5 + $0x3d0] sm:$0xff]
        %v1375 = vld [vmem:[%s5 + $0x3d8] sm:$0xff]
        %v1376 = vld [vmem:[%s5 + $0x3e0] sm:$0xff]
        %v1377 = vld [vmem:[%s5 + $0x3e8] sm:$0xff]
        %v1378 = vld [vmem:[%s5 + $0x3f0] sm:$0xff]
        %v1379 = vld [vmem:[%s5 + $0x3f8] sm:$0xff]
        %1380 = vmatprep.subr.mxu0 0.0
        %1381 = vmatpush1.msra.mxu0 %v1252
        %1382 = vmatprep.subr.mxu0 0.0
        %1383 = vmatpush1.msra.mxu0 %v1253
        %1384 = vmatprep.subr.mxu0 0.0
        %1385 = vmatpush1.msra.mxu0 %v1254
        %1386 = vmatprep.subr.mxu0 0.0
        %1387 = vmatpush1.msra.mxu0 %v1255
        %1388 = vmatprep.subr.mxu0 0.0
        %1389 = vmatpush1.msra.mxu0 %v1256
        %1390 = vmatprep.subr.mxu0 0.0
        %1391 = vmatpush1.msra.mxu0 %v1257
        %1392 = vmatprep.subr.mxu0 0.0
        %1393 = vmatpush1.msra.mxu0 %v1258
        %1394 = vmatprep.subr.mxu0 0.0
        %1395 = vmatpush1.msra.mxu0 %v1259
        %1396 = vmatprep.subr.mxu0 0.0
        %1397 = vmatpush1.msra.mxu0 %v1260
        %1398 = vmatprep.subr.mxu0 0.0
        %1399 = vmatpush1.msra.mxu0 %v1261
        %1400 = vmatprep.subr.mxu0 0.0
        %1401 = vmatpush1.msra.mxu0 %v1262
        %1402 = vmatprep.subr.mxu0 0.0
        %1403 = vmatpush1.msra.mxu0 %v1263
        %1404 = vmatprep.subr.mxu0 0.0
        %1405 = vmatpush1.msra.mxu0 %v1264
        %1406 = vmatprep.subr.mxu0 0.0
        %1407 = vmatpush1.msra.mxu0 %v1265
        %1408 = vmatprep.subr.mxu0 0.0
        %1409 = vmatpush1.msra.mxu0 %v1266
        %1410 = vmatprep.subr.mxu0 0.0
        %1411 = vmatpush1.msra.mxu0 %v1267
        %1412 = vmatprep.subr.mxu0 0.0
        %1413 = vmatpush1.msra.mxu0 %v1268
        %1414 = vmatprep.subr.mxu0 0.0
        %1415 = vmatpush1.msra.mxu0 %v1269
        %1416 = vmatprep.subr.mxu0 0.0
        %1417 = vmatpush1.msra.mxu0 %v1270
        %1418 = vmatprep.subr.mxu0 0.0
        %1419 = vmatpush1.msra.mxu0 %v1271
        %1420 = vmatprep.subr.mxu0 0.0
        %1421 = vmatpush1.msra.mxu0 %v1272
        %1422 = vmatprep.subr.mxu0 0.0
        %1423 = vmatpush1.msra.mxu0 %v1273
        %1424 = vmatprep.subr.mxu0 0.0
        %1425 = vmatpush1.msra.mxu0 %v1274
        %1426 = vmatprep.subr.mxu0 0.0
        %1427 = vmatpush1.msra.mxu0 %v1275
        %1428 = vmatprep.subr.mxu0 0.0
        %1429 = vmatpush1.msra.mxu0 %v1276
        %1430 = vmatprep.subr.mxu0 0.0
        %1431 = vmatpush1.msra.mxu0 %v1277
        %1432 = vmatprep.subr.mxu0 0.0
        %1433 = vmatpush1.msra.mxu0 %v1278
        %1434 = vmatprep.subr.mxu0 0.0
        %1435 = vmatpush1.msra.mxu0 %v1279
        %1436 = vmatprep.subr.mxu0 0.0
        %1437 = vmatpush1.msra.mxu0 %v1280
        %1438 = vmatprep.subr.mxu0 0.0
        %1439 = vmatpush1.msra.mxu0 %v1281
        %1440 = vmatprep.subr.mxu0 0.0
        %1441 = vmatpush1.msra.mxu0 %v1282
        %1442 = vmatprep.subr.mxu0 0.0
        %1443 = vmatpush1.msra.mxu0 %v1283
        %1444 = vmatprep.mubr.f32.mxu0 %v1237
        %1445 = vmatmul.mubr.f32.gmra.mrb[0].mxu0 %v1236
        %v1446 = vpop.f32.mrb[0].mxu0
        %v1447 = vadd.f32 0.0, %v1446
        %v1448 = vpop.f32.mrb[0].mxu0
        %1449 = vmatprep.mubr.f32.mxu0 %v1245
        %1450 = vmatmul.mubr.f32.gmra.mrb[0].mxu0 %v1244
        %v1451 = vpop.f32.mrb[0].mxu0
        %v1452 = vadd.f32 0.0, %v1451
        %v1453 = vpop.f32.mrb[0].mxu0
        %1454 = vdwg.mxu0
        %1455 = vmatprep.subr.mxu0 0.0
        %1456 = vmatpush1.msra.mxu0 %v1284
        %1457 = vmatprep.subr.mxu0 0.0
        %1458 = vmatpush1.msra.mxu0 %v1285
        %1459 = vmatprep.subr.mxu0 0.0
        %1460 = vmatpush1.msra.mxu0 %v1286
        %1461 = vmatprep.subr.mxu0 0.0
        %1462 = vmatpush1.msra.mxu0 %v1287
        %1463 = vmatprep.subr.mxu0 0.0
        %1464 = vmatpush1.msra.mxu0 %v1288
        %1465 = vmatprep.subr.mxu0 0.0
        %1466 = vmatpush1.msra.mxu0 %v1289
        %1467 = vmatprep.subr.mxu0 0.0
        %1468 = vmatpush1.msra.mxu0 %v1290
        %1469 = vmatprep.subr.mxu0 0.0
        %1470 = vmatpush1.msra.mxu0 %v1291
        %1471 = vmatprep.subr.mxu0 0.0
        %1472 = vmatpush1.msra.mxu0 %v1292
        %1473 = vmatprep.subr.mxu0 0.0
        %1474 = vmatpush1.msra.mxu0 %v1293
        %1475 = vmatprep.subr.mxu0 0.0
        %1476 = vmatpush1.msra.mxu0 %v1294
        %1477 = vmatprep.subr.mxu0 0.0
        %1478 = vmatpush1.msra.mxu0 %v1295
        %1479 = vmatprep.subr.mxu0 0.0
        %1480 = vmatpush1.msra.mxu0 %v1296
        %1481 = vmatprep.subr.mxu0 0.0
        %1482 = vmatpush1.msra.mxu0 %v1297
        %1483 = vmatprep.subr.mxu0 0.0
        %1484 = vmatpush1.msra.mxu0 %v1298
        %1485 = vmatprep.subr.mxu0 0.0
        %1486 = vmatpush1.msra.mxu0 %v1299
        %1487 = vmatprep.subr.mxu0 0.0
        %1488 = vmatpush1.msra.mxu0 %v1300
        %1489 = vmatprep.subr.mxu0 0.0
        %1490 = vmatpush1.msra.mxu0 %v1301
        %1491 = vmatprep.subr.mxu0 0.0
        %1492 = vmatpush1.msra.mxu0 %v1302
        %1493 = vmatprep.subr.mxu0 0.0
        %1494 = vmatpush1.msra.mxu0 %v1303
        %1495 = vmatprep.subr.mxu0 0.0
        %1496 = vmatpush1.msra.mxu0 %v1304
        %1497 = vmatprep.subr.mxu0 0.0
        %1498 = vmatpush1.msra.mxu0 %v1305
        %1499 = vmatprep.subr.mxu0 0.0
        %1500 = vmatpush1.msra.mxu0 %v1306
        %1501 = vmatprep.subr.mxu0 0.0
        %1502 = vmatpush1.msra.mxu0 %v1307
        %1503 = vmatprep.subr.mxu0 0.0
        %1504 = vmatpush1.msra.mxu0 %v1308
        %1505 = vmatprep.subr.mxu0 0.0
        %1506 = vmatpush1.msra.mxu0 %v1309
        %1507 = vmatprep.subr.mxu0 0.0
        %1508 = vmatpush1.msra.mxu0 %v1310
        %1509 = vmatprep.subr.mxu0 0.0
        %1510 = vmatpush1.msra.mxu0 %v1311
        %1511 = vmatprep.subr.mxu0 0.0
        %1512 = vmatpush1.msra.mxu0 %v1312
        %1513 = vmatprep.subr.mxu0 0.0
        %1514 = vmatpush1.msra.mxu0 %v1313
        %1515 = vmatprep.subr.mxu0 0.0
        %1516 = vmatpush1.msra.mxu0 %v1314
        %1517 = vmatprep.subr.mxu0 0.0
        %1518 = vmatpush1.msra.mxu0 %v1315
        %1519 = vmatprep.mubr.f32.mxu0 %v1239
        %1520 = vmatmul.mubr.f32.gmra.mrb[0].mxu0 %v1238
        %v1521 = vpop.f32.mrb[0].mxu0
        %v1522 = vadd.f32 %v1447, %v1521
        %v1523 = vpop.f32.mrb[0].mxu0
        %1524 = vmatprep.mubr.f32.mxu0 %v1247
        %1525 = vmatmul.mubr.f32.gmra.mrb[0].mxu0 %v1246
        %v1526 = vpop.f32.mrb[0].mxu0
        %v1527 = vadd.f32 %v1452, %v1526
        %v1528 = vpop.f32.mrb[0].mxu0
        %1529 = vdwg.mxu0
        %1530 = vmatprep.subr.mxu0 0.0
        %1531 = vmatpush1.msra.mxu0 %v1316
        %1532 = vmatprep.subr.mxu0 0.0
        %1533 = vmatpush1.msra.mxu0 %v1317
        %1534 = vmatprep.subr.mxu0 0.0
        %1535 = vmatpush1.msra.mxu0 %v1318
        %1536 = vmatprep.subr.mxu0 0.0
        %1537 = vmatpush1.msra.mxu0 %v1319
        %1538 = vmatprep.subr.mxu0 0.0
        %1539 = vmatpush1.msra.mxu0 %v1320
        %1540 = vmatprep.subr.mxu0 0.0
        %1541 = vmatpush1.msra.mxu0 %v1321
        %1542 = vmatprep.subr.mxu0 0.0
        %1543 = vmatpush1.msra.mxu0 %v1322
        %1544 = vmatprep.subr.mxu0 0.0
        %1545 = vmatpush1.msra.mxu0 %v1323
        %1546 = vmatprep.subr.mxu0 0.0
        %1547 = vmatpush1.msra.mxu0 %v1324
        %1548 = vmatprep.subr.mxu0 0.0
        %1549 = vmatpush1.msra.mxu0 %v1325
        %1550 = vmatprep.subr.mxu0 0.0
        %1551 = vmatpush1.msra.mxu0 %v1326
        %1552 = vmatprep.subr.mxu0 0.0
        %1553 = vmatpush1.msra.mxu0 %v1327
        %1554 = vmatprep.subr.mxu0 0.0
        %1555 = vmatpush1.msra.mxu0 %v1328
        %1556 = vmatprep.subr.mxu0 0.0
        %1557 = vmatpush1.msra.mxu0 %v1329
        %1558 = vmatprep.subr.mxu0 0.0
        %1559 = vmatpush1.msra.mxu0 %v1330
        %1560 = vmatprep.subr.mxu0 0.0
        %1561 = vmatpush1.msra.mxu0 %v1331
        %1562 = vmatprep.subr.mxu0 0.0
        %1563 = vmatpush1.msra.mxu0 %v1332
        %1564 = vmatprep.subr.mxu0 0.0
        %1565 = vmatpush1.msra.mxu0 %v1333
        %1566 = vmatprep.subr.mxu0 0.0
        %1567 = vmatpush1.msra.mxu0 %v1334
        %1568 = vmatprep.subr.mxu0 0.0
        %1569 = vmatpush1.msra.mxu0 %v1335
        %1570 = vmatprep.subr.mxu0 0.0
        %1571 = vmatpush1.msra.mxu0 %v1336
        %1572 = vmatprep.subr.mxu0 0.0
        %1573 = vmatpush1.msra.mxu0 %v1337
        %1574 = vmatprep.subr.mxu0 0.0
        %1575 = vmatpush1.msra.mxu0 %v1338
        %1576 = vmatprep.subr.mxu0 0.0
        %1577 = vmatpush1.msra.mxu0 %v1339
        %1578 = vmatprep.subr.mxu0 0.0
        %1579 = vmatpush1.msra.mxu0 %v1340
        %1580 = vmatprep.subr.mxu0 0.0
        %1581 = vmatpush1.msra.mxu0 %v1341
        %1582 = vmatprep.subr.mxu0 0.0
        %1583 = vmatpush1.msra.mxu0 %v1342
        %1584 = vmatprep.subr.mxu0 0.0
        %1585 = vmatpush1.msra.mxu0 %v1343
        %1586 = vmatprep.subr.mxu0 0.0
        %1587 = vmatpush1.msra.mxu0 %v1344
        %1588 = vmatprep.subr.mxu0 0.0
        %1589 = vmatpush1.msra.mxu0 %v1345
        %1590 = vmatprep.subr.mxu0 0.0
        %1591 = vmatpush1.msra.mxu0 %v1346
        %1592 = vmatprep.subr.mxu0 0.0
        %1593 = vmatpush1.msra.mxu0 %v1347
        %1594 = vmatprep.mubr.f32.mxu0 %v1241
        %1595 = vmatmul.mubr.f32.gmra.mrb[0].mxu0 %v1240
        %v1596 = vpop.f32.mrb[0].mxu0
        %v1597 = vadd.f32 %v1522, %v1596
        %v1598 = vpop.f32.mrb[0].mxu0
        %1599 = vmatprep.mubr.f32.mxu0 %v1249
        %1600 = vmatmul.mubr.f32.gmra.mrb[0].mxu0 %v1248
        %v1601 = vpop.f32.mrb[0].mxu0
        %v1602 = vadd.f32 %v1527, %v1601
        %v1603 = vpop.f32.mrb[0].mxu0
        %1604 = vdwg.mxu0
        %1605 = vmatprep.subr.mxu0 0.0
        %1606 = vmatpush1.msra.mxu0 %v1348
        %1607 = vmatprep.subr.mxu0 0.0
        %1608 = vmatpush1.msra.mxu0 %v1349
        %1609 = vmatprep.subr.mxu0 0.0
        %1610 = vmatpush1.msra.mxu0 %v1350
        %1611 = vmatprep.subr.mxu0 0.0
        %1612 = vmatpush1.msra.mxu0 %v1351
        %1613 = vmatprep.subr.mxu0 0.0
        %1614 = vmatpush1.msra.mxu0 %v1352
        %1615 = vmatprep.subr.mxu0 0.0
        %1616 = vmatpush1.msra.mxu0 %v1353
        %1617 = vmatprep.subr.mxu0 0.0
        %1618 = vmatpush1.msra.mxu0 %v1354
        %1619 = vmatprep.subr.mxu0 0.0
        %1620 = vmatpush1.msra.mxu0 %v1355
        %1621 = vmatprep.subr.mxu0 0.0
        %1622 = vmatpush1.msra.mxu0 %v1356
        %1623 = vmatprep.subr.mxu0 0.0
        %1624 = vmatpush1.msra.mxu0 %v1357
        %1625 = vmatprep.subr.mxu0 0.0
        %1626 = vmatpush1.msra.mxu0 %v1358
        %1627 = vmatprep.subr.mxu0 0.0
        %1628 = vmatpush1.msra.mxu0 %v1359
        %1629 = vmatprep.subr.mxu0 0.0
        %1630 = vmatpush1.msra.mxu0 %v1360
        %1631 = vmatprep.subr.mxu0 0.0
        %1632 = vmatpush1.msra.mxu0 %v1361
        %1633 = vmatprep.subr.mxu0 0.0
        %1634 = vmatpush1.msra.mxu0 %v1362
        %1635 = vmatprep.subr.mxu0 0.0
        %1636 = vmatpush1.msra.mxu0 %v1363
        %1637 = vmatprep.subr.mxu0 0.0
        %1638 = vmatpush1.msra.mxu0 %v1364
        %1639 = vmatprep.subr.mxu0 0.0
        %1640 = vmatpush1.msra.mxu0 %v1365
        %1641 = vmatprep.subr.mxu0 0.0
        %1642 = vmatpush1.msra.mxu0 %v1366
        %1643 = vmatprep.subr.mxu0 0.0
        %1644 = vmatpush1.msra.mxu0 %v1367
        %1645 = vmatprep.subr.mxu0 0.0
        %1646 = vmatpush1.msra.mxu0 %v1368
        %1647 = vmatprep.subr.mxu0 0.0
        %1648 = vmatpush1.msra.mxu0 %v1369
        %1649 = vmatprep.subr.mxu0 0.0
        %1650 = vmatpush1.msra.mxu0 %v1370
        %1651 = vmatprep.subr.mxu0 0.0
        %1652 = vmatpush1.msra.mxu0 %v1371
        %1653 = vmatprep.subr.mxu0 0.0
        %1654 = vmatpush1.msra.mxu0 %v1372
        %1655 = vmatprep.subr.mxu0 0.0
        %1656 = vmatpush1.msra.mxu0 %v1373
        %1657 = vmatprep.subr.mxu0 0.0
        %1658 = vmatpush1.msra.mxu0 %v1374
        %1659 = vmatprep.subr.mxu0 0.0
        %1660 = vmatpush1.msra.mxu0 %v1375
        %1661 = vmatprep.subr.mxu0 0.0
        %1662 = vmatpush1.msra.mxu0 %v1376
        %1663 = vmatprep.subr.mxu0 0.0
        %1664 = vmatpush1.msra.mxu0 %v1377
        %1665 = vmatprep.subr.mxu0 0.0
        %1666 = vmatpush1.msra.mxu0 %v1378
        %1667 = vmatprep.subr.mxu0 0.0
        %1668 = vmatpush1.msra.mxu0 %v1379
        %1669 = vmatprep.mubr.f32.mxu0 %v1243
        %1670 = vmatmul.mubr.f32.gmra.mrb[0].mxu0 %v1242
        %v1671 = vpop.f32.mrb[0].mxu0
        %v1672 = vadd.f32 %v1597, %v1671
        %v1673 = vpop.f32.mrb[0].mxu0
        %1674 = vmatprep.mubr.f32.mxu0 %v1251
        %1675 = vmatmul.mubr.f32.gmra.mrb[0].mxu0 %v1250
        %v1676 = vpop.f32.mrb[0].mxu0
        %v1677 = vadd.f32 %v1602, %v1676
        %v1678 = vpop.f32.mrb[0].mxu0
        %1679 = vdwg.mxu0
        %v1680 = vld [vmem:[%s2] sm:$0xff]
        %v1681 = vld [vmem:[%s2 + $0x8] sm:$0xff]
        %1682 = vset.pattern.permute.xlu0 1
        %1683 = vperm.xlu0 %1682, %v951
        %v1684 = vpop.permute.xlu0 %1683
        %1686 = vset.pattern.permute.xlu0 1
        %1687 = vperm.xlu0 %1686, %v952
        %v1688 = vpop.permute.xlu0 %1687
        %vm1690 = vcmask 130048
        %v1692 = vsel %vm1690, %v1680, 0
        %v1695 = vsel %vm1690, %v1681, 0
        %1697 = vmatprep.subr.mxu0 0.0
        %1698 = vmatpush1.msra.mxu0 %v1672
        %1699 = vmatprep.subr.mxu0 0.0
        %1700 = vmatpush1.msra.mxu0 %v1677
        %1701 = vmatprep.subr.mxu0 0.0
        %1702 = vmatpush1.msra.mxu0 0.0
        %1703 = vmatprep.subr.mxu0 0.0
        %1704 = vmatpush1.msra.mxu0 0.0
        %1705 = vmatprep.subr.mxu0 0.0
        %1706 = vmatpush1.msra.mxu0 0.0
        %1707 = vmatprep.subr.mxu0 0.0
        %1708 = vmatpush1.msra.mxu0 0.0
        %1709 = vmatprep.subr.mxu0 0.0
        %1710 = vmatpush1.msra.mxu0 0.0
        %1711 = vmatprep.subr.mxu0 0.0
        %1712 = vmatpush1.msra.mxu0 0.0
        %1713 = vmatprep.subr.mxu0 0.0
        %1714 = vmatpush1.msra.mxu0 0.0
        %1715 = vmatprep.subr.mxu0 0.0
        %1716 = vmatpush1.msra.mxu0 0.0
        %1717 = vmatprep.subr.mxu0 0.0
        %1718 = vmatpush1.msra.mxu0 0.0
        %1719 = vmatprep.subr.mxu0 0.0
        %1720 = vmatpush1.msra.mxu0 0.0
        %1721 = vmatprep.subr.mxu0 0.0
        %1722 = vmatpush1.msra.mxu0 0.0
        %1723 = vmatprep.subr.mxu0 0.0
        %1724 = vmatpush1.msra.mxu0 0.0
        %1725 = vmatprep.subr.mxu0 0.0
        %1726 = vmatpush1.msra.mxu0 0.0
        %1727 = vmatprep.subr.mxu0 0.0
        %1728 = vmatpush1.msra.mxu0 0.0
        %1729 = vmatprep.subr.mxu0 0.0
        %1730 = vmatpush1.msra.mxu0 0.0
        %1731 = vmatprep.subr.mxu0 0.0
        %1732 = vmatpush1.msra.mxu0 0.0
        %1733 = vmatprep.subr.mxu0 0.0
        %1734 = vmatpush1.msra.mxu0 0.0
        %1735 = vmatprep.subr.mxu0 0.0
        %1736 = vmatpush1.msra.mxu0 0.0
        %1737 = vmatprep.subr.mxu0 0.0
        %1738 = vmatpush1.msra.mxu0 0.0
        %1739 = vmatprep.subr.mxu0 0.0
        %1740 = vmatpush1.msra.mxu0 0.0
        %1741 = vmatprep.subr.mxu0 0.0
        %1742 = vmatpush1.msra.mxu0 0.0
        %1743 = vmatprep.subr.mxu0 0.0
        %1744 = vmatpush1.msra.mxu0 0.0
        %1745 = vmatprep.subr.mxu0 0.0
        %1746 = vmatpush1.msra.mxu0 0.0
        %1747 = vmatprep.subr.mxu0 0.0
        %1748 = vmatpush1.msra.mxu0 0.0
        %1749 = vmatprep.subr.mxu0 0.0
        %1750 = vmatpush1.msra.mxu0 0.0
        %1751 = vmatprep.subr.mxu0 0.0
        %1752 = vmatpush1.msra.mxu0 0.0
        %1753 = vmatprep.subr.mxu0 0.0
        %1754 = vmatpush1.msra.mxu0 0.0
        %1755 = vmatprep.subr.mxu0 0.0
        %1756 = vmatpush1.msra.mxu0 0.0
        %1757 = vmatprep.subr.mxu0 0.0
        %1758 = vmatpush1.msra.mxu0 0.0
        %1759 = vmatprep.subr.mxu0 0.0
        %1760 = vmatpush1.msra.mxu0 0.0
        %1761 = vmatprep.mubr.f32.mxu0 0.0
        %1762 = vmatmul.mubr.f32.gmra.mrb[0].mxu0 %v1692
        %v1763 = vpop.f32.mrb[0].mxu0
        %v1764 = vadd.f32 %v1684, %v1763
        %v1765 = vpop.f32.mrb[0].mxu0
        %1766 = vmatprep.mubr.f32.mxu0 0.0
        %1767 = vmatmul.mubr.f32.gmra.mrb[0].mxu0 %v1695
        %v1768 = vpop.f32.mrb[0].mxu0
        %v1769 = vadd.f32 %v1688, %v1768
        %v1770 = vpop.f32.mrb[0].mxu0
        %1771 = vdwg.mxu0
        %v1772 = vmax.f32 %v1764, 0.0
        %v1773 = vmax.f32 %v1769, 0.0
        %v1774 = vld [vmem:[%s2 + $0x10] sm:$0xff]
        %v1775 = vld [vmem:[%s2 + $0x18] sm:$0xff]
        %1776 = vset.pattern.permute.xlu0 2
        %1777 = vperm.xlu0 %1776, %v951
        %v1778 = vpop.permute.xlu0 %1777
        %1780 = vset.pattern.permute.xlu0 2
        %1781 = vperm.xlu0 %1780, %v952
        %v1782 = vpop.permute.xlu0 %1781
        %v1785 = vsel %vm1690, %v1774, 0
        %v1788 = vsel %vm1690, %v1775, 0
        %1790 = vmatprep.subr.mxu0 0.0
        %1791 = vmatpush1.msra.mxu0 %v1772
        %1792 = vmatprep.subr.mxu0 0.0
        %1793 = vmatpush1.msra.mxu0 %v1773
        %1794 = vmatprep.subr.mxu0 0.0
        %1795 = vmatpush1.msra.mxu0 0.0
        %1796 = vmatprep.subr.mxu0 0.0
        %1797 = vmatpush1.msra.mxu0 0.0
        %1798 = vmatprep.subr.mxu0 0.0
        %1799 = vmatpush1.msra.mxu0 0.0
        %1800 = vmatprep.subr.mxu0 0.0
        %1801 = vmatpush1.msra.mxu0 0.0
        %1802 = vmatprep.subr.mxu0 0.0
        %1803 = vmatpush1.msra.mxu0 0.0
        %1804 = vmatprep.subr.mxu0 0.0
        %1805 = vmatpush1.msra.mxu0 0.0
        %1806 = vmatprep.subr.mxu0 0.0
        %1807 = vmatpush1.msra.mxu0 0.0
        %1808 = vmatprep.subr.mxu0 0.0
        %1809 = vmatpush1.msra.mxu0 0.0
        %1810 = vmatprep.subr.mxu0 0.0
        %1811 = vmatpush1.msra.mxu0 0.0
        %1812 = vmatprep.subr.mxu0 0.0
        %1813 = vmatpush1.msra.mxu0 0.0
        %1814 = vmatprep.subr.mxu0 0.0
        %1815 = vmatpush1.msra.mxu0 0.0
        %1816 = vmatprep.subr.mxu0 0.0
        %1817 = vmatpush1.msra.mxu0 0.0
        %1818 = vmatprep.subr.mxu0 0.0
        %1819 = vmatpush1.msra.mxu0 0.0
        %1820 = vmatprep.subr.mxu0 0.0
        %1821 = vmatpush1.msra.mxu0 0.0
        %1822 = vmatprep.subr.mxu0 0.0
        %1823 = vmatpush1.msra.mxu0 0.0
        %1824 = vmatprep.subr.mxu0 0.0
        %1825 = vmatpush1.msra.mxu0 0.0
        %1826 = vmatprep.subr.mxu0 0.0
        %1827 = vmatpush1.msra.mxu0 0.0
        %1828 = vmatprep.subr.mxu0 0.0
        %1829 = vmatpush1.msra.mxu0 0.0
        %1830 = vmatprep.subr.mxu0 0.0
        %1831 = vmatpush1.msra.mxu0 0.0
        %1832 = vmatprep.subr.mxu0 0.0
        %1833 = vmatpush1.msra.mxu0 0.0
        %1834 = vmatprep.subr.mxu0 0.0
        %1835 = vmatpush1.msra.mxu0 0.0
        %1836 = vmatprep.subr.mxu0 0.0
        %1837 = vmatpush1.msra.mxu0 0.0
        %1838 = vmatprep.subr.mxu0 0.0
        %1839 = vmatpush1.msra.mxu0 0.0
        %1840 = vmatprep.subr.mxu0 0.0
        %1841 = vmatpush1.msra.mxu0 0.0
        %1842 = vmatprep.subr.mxu0 0.0
        %1843 = vmatpush1.msra.mxu0 0.0
        %1844 = vmatprep.subr.mxu0 0.0
        %1845 = vmatpush1.msra.mxu0 0.0
        %1846 = vmatprep.subr.mxu0 0.0
        %1847 = vmatpush1.msra.mxu0 0.0
        %1848 = vmatprep.subr.mxu0 0.0
        %1849 = vmatpush1.msra.mxu0 0.0
        %1850 = vmatprep.subr.mxu0 0.0
        %1851 = vmatpush1.msra.mxu0 0.0
        %1852 = vmatprep.subr.mxu0 0.0
        %1853 = vmatpush1.msra.mxu0 0.0
        %1854 = vmatprep.mubr.f32.mxu0 0.0
        %1855 = vmatmul.mubr.f32.gmra.mrb[0].mxu0 %v1785
        %v1856 = vpop.f32.mrb[0].mxu0
        %v1857 = vadd.f32 %v1778, %v1856
        %v1858 = vpop.f32.mrb[0].mxu0
        %1859 = vmatprep.mubr.f32.mxu0 0.0
        %1860 = vmatmul.mubr.f32.gmra.mrb[0].mxu0 %v1788
        %v1861 = vpop.f32.mrb[0].mxu0
        %v1862 = vadd.f32 %v1782, %v1861
        %v1863 = vpop.f32.mrb[0].mxu0
        %1864 = vdwg.mxu0
        %v1865 = vxor.u32 %v1857, 2147483648
        %v1866 = vxor.u32 %v1862, 2147483648
        %v1867 = vmul.f32 %v1865, 1.442695
        %v1868 = vpow.pop %v1867
        %v1869 = vmul.f32 %v1866, 1.442695
        %v1870 = vpow.pop %v1869
        %v1871 = vadd.f32 %v1868, 1.0
        %v1872 = vadd.f32 %v1870, 1.0
        %v1873 = vrcp.pop %v1871
        %v1874 = vmul.f32 1.0, %v1873
        %v1875 = vrcp.pop %v1872
        %v1876 = vmul.f32 1.0, %v1875
        %v1877 = vld [vmem:[%s6] sm:$0xff]
        %v1878 = vld [vmem:[%s6 + $0x8] sm:$0xff]
        %v1879 = vld [vmem:[%s6 + $0x10] sm:$0xff]
        %v1880 = vld [vmem:[%s6 + $0x18] sm:$0xff]
        %v1885 = vcombine.high %v1877, %v1877
        %v1886 = vcombine.high %v1878, %v1878
        %v1887 = vcombine.high %v1879, %v1879
        %v1888 = vcombine.high %v1880, %v1880
        %vm1889 = vcmask 31744
        %v1891 = vsel %vm1889, %v1874, 0
        %v1894 = vsel %vm1889, %v1876, 0
        %vm1896 = vcmask 1043456
        %v1897 = vsel %vm1896, %v1877, 0
        %v1899 = vsel %vm1896, %v1885, 0
        %v1901 = vsel %vm1896, %v1878, 0
        %v1903 = vsel %vm1896, %v1886, 0
        %v1905 = vsel %vm1896, %v1879, 0
        %v1907 = vsel %vm1896, %v1887, 0
        %v1909 = vsel %vm1896, %v1880, 0
        %v1911 = vsel %vm1896, %v1888, 0
        %1913 = vmatprep.subr.mxu0 %v1899
        %1914 = vmatpush1.msra.mxu0 %v1897
        %1915 = vmatprep.subr.mxu0 0.0
        %1916 = vmatpush1.msra.mxu0 0.0
        %1917 = vmatprep.subr.mxu0 0.0
        %1918 = vmatpush1.msra.mxu0 0.0
        %1919 = vmatprep.subr.mxu0 0.0
        %1920 = vmatpush1.msra.mxu0 0.0
        %1921 = vmatprep.subr.mxu0 0.0
        %1922 = vmatpush1.msra.mxu0 0.0
        %1923 = vmatprep.subr.mxu0 0.0
        %1924 = vmatpush1.msra.mxu0 0.0
        %1925 = vmatprep.subr.mxu0 0.0
        %1926 = vmatpush1.msra.mxu0 0.0
        %1927 = vmatprep.subr.mxu0 0.0
        %1928 = vmatpush1.msra.mxu0 0.0
        %1929 = vmatprep.subr.mxu0 0.0
        %1930 = vmatpush1.msra.mxu0 0.0
        %1931 = vmatprep.subr.mxu0 0.0
        %1932 = vmatpush1.msra.mxu0 0.0
        %1933 = vmatprep.subr.mxu0 0.0
        %1934 = vmatpush1.msra.mxu0 0.0
        %1935 = vmatprep.subr.mxu0 0.0
        %1936 = vmatpush1.msra.mxu0 0.0
        %1937 = vmatprep.subr.mxu0 0.0
        %1938 = vmatpush1.msra.mxu0 0.0
        %1939 = vmatprep.subr.mxu0 0.0
        %1940 = vmatpush1.msra.mxu0 0.0
        %1941 = vmatprep.subr.mxu0 0.0
        %1942 = vmatpush1.msra.mxu0 0.0
        %1943 = vmatprep.subr.mxu0 0.0
        %1944 = vmatpush1.msra.mxu0 0.0
        %1945 = vmatprep.subr.mxu0 0.0
        %1946 = vmatpush1.msra.mxu0 0.0
        %1947 = vmatprep.subr.mxu0 0.0
        %1948 = vmatpush1.msra.mxu0 0.0
        %1949 = vmatprep.subr.mxu0 0.0
        %1950 = vmatpush1.msra.mxu0 0.0
        %1951 = vmatprep.subr.mxu0 0.0
        %1952 = vmatpush1.msra.mxu0 0.0
        %1953 = vmatprep.subr.mxu0 0.0
        %1954 = vmatpush1.msra.mxu0 0.0
        %1955 = vmatprep.subr.mxu0 0.0
        %1956 = vmatpush1.msra.mxu0 0.0
        %1957 = vmatprep.subr.mxu0 0.0
        %1958 = vmatpush1.msra.mxu0 0.0
        %1959 = vmatprep.subr.mxu0 0.0
        %1960 = vmatpush1.msra.mxu0 0.0
        %1961 = vmatprep.subr.mxu0 0.0
        %1962 = vmatpush1.msra.mxu0 0.0
        %1963 = vmatprep.subr.mxu0 0.0
        %1964 = vmatpush1.msra.mxu0 0.0
        %1965 = vmatprep.subr.mxu0 0.0
        %1966 = vmatpush1.msra.mxu0 0.0
        %1967 = vmatprep.subr.mxu0 0.0
        %1968 = vmatpush1.msra.mxu0 0.0
        %1969 = vmatprep.subr.mxu0 0.0
        %1970 = vmatpush1.msra.mxu0 0.0
        %1971 = vmatprep.subr.mxu0 0.0
        %1972 = vmatpush1.msra.mxu0 0.0
        %1973 = vmatprep.subr.mxu0 0.0
        %1974 = vmatpush1.msra.mxu0 0.0
        %1975 = vmatprep.subr.mxu0 0.0
        %1976 = vmatpush1.msra.mxu0 0.0
        %1977 = vmatprep.mubr.f32.mxu0 0.0
        %1978 = vmatmul.mubr.f32.gmra.mrb[0].mxu0 %v1891
        %v1979 = vpop.f32.mrb[0].mxu0
        %v1980 = vadd.f32 0.0, %v1979
        %v1981 = vpop.f32.mrb[0].mxu0
        %v1982 = vadd.f32 0.0, %v1981
        %1983 = vmatprep.mubr.f32.mxu0 0.0
        %1984 = vmatmul.mubr.f32.gmra.mrb[0].mxu0 %v1894
        %v1985 = vpop.f32.mrb[0].mxu0
        %v1986 = vadd.f32 0.0, %v1985
        %v1987 = vpop.f32.mrb[0].mxu0
        %v1988 = vadd.f32 0.0, %v1987
        %1989 = vdwg.mxu0
        %1990 = vmatprep.subr.mxu0 %v1903
        %1991 = vmatpush1.msra.mxu0 %v1901
        %1992 = vmatprep.subr.mxu0 0.0
        %1993 = vmatpush1.msra.mxu0 0.0
        %1994 = vmatprep.subr.mxu0 0.0
        %1995 = vmatpush1.msra.mxu0 0.0
        %1996 = vmatprep.subr.mxu0 0.0
        %1997 = vmatpush1.msra.mxu0 0.0
        %1998 = vmatprep.subr.mxu0 0.0
        %1999 = vmatpush1.msra.mxu0 0.0
        %2000 = vmatprep.subr.mxu0 0.0
        %2001 = vmatpush1.msra.mxu0 0.0
        %2002 = vmatprep.subr.mxu0 0.0
        %2003 = vmatpush1.msra.mxu0 0.0
        %2004 = vmatprep.subr.mxu0 0.0
        %2005 = vmatpush1.msra.mxu0 0.0
        %2006 = vmatprep.subr.mxu0 0.0
        %2007 = vmatpush1.msra.mxu0 0.0
        %2008 = vmatprep.subr.mxu0 0.0
        %2009 = vmatpush1.msra.mxu0 0.0
        %2010 = vmatprep.subr.mxu0 0.0
        %2011 = vmatpush1.msra.mxu0 0.0
        %2012 = vmatprep.subr.mxu0 0.0
        %2013 = vmatpush1.msra.mxu0 0.0
        %2014 = vmatprep.subr.mxu0 0.0
        %2015 = vmatpush1.msra.mxu0 0.0
        %2016 = vmatprep.subr.mxu0 0.0
        %2017 = vmatpush1.msra.mxu0 0.0
        %2018 = vmatprep.subr.mxu0 0.0
        %2019 = vmatpush1.msra.mxu0 0.0
        %2020 = vmatprep.subr.mxu0 0.0
        %2021 = vmatpush1.msra.mxu0 0.0
        %2022 = vmatprep.subr.mxu0 0.0
        %2023 = vmatpush1.msra.mxu0 0.0
        %2024 = vmatprep.subr.mxu0 0.0
        %2025 = vmatpush1.msra.mxu0 0.0
        %2026 = vmatprep.subr.mxu0 0.0
        %2027 = vmatpush1.msra.mxu0 0.0
        %2028 = vmatprep.subr.mxu0 0.0
        %2029 = vmatpush1.msra.mxu0 0.0
        %2030 = vmatprep.subr.mxu0 0.0
        %2031 = vmatpush1.msra.mxu0 0.0
        %2032 = vmatprep.subr.mxu0 0.0
        %2033 = vmatpush1.msra.mxu0 0.0
        %2034 = vmatprep.subr.mxu0 0.0
        %2035 = vmatpush1.msra.mxu0 0.0
        %2036 = vmatprep.subr.mxu0 0.0
        %2037 = vmatpush1.msra.mxu0 0.0
        %2038 = vmatprep.subr.mxu0 0.0
        %2039 = vmatpush1.msra.mxu0 0.0
        %2040 = vmatprep.subr.mxu0 0.0
        %2041 = vmatpush1.msra.mxu0 0.0
        %2042 = vmatprep.subr.mxu0 0.0
        %2043 = vmatpush1.msra.mxu0 0.0
        %2044 = vmatprep.subr.mxu0 0.0
        %2045 = vmatpush1.msra.mxu0 0.0
        %2046 = vmatprep.subr.mxu0 0.0
        %2047 = vmatpush1.msra.mxu0 0.0
        %2048 = vmatprep.subr.mxu0 0.0
        %2049 = vmatpush1.msra.mxu0 0.0
        %2050 = vmatprep.subr.mxu0 0.0
        %2051 = vmatpush1.msra.mxu0 0.0
        %2052 = vmatprep.subr.mxu0 0.0
        %2053 = vmatpush1.msra.mxu0 0.0
        %2054 = vmatprep.mubr.f32.mxu0 0.0
        %2055 = vmatmul.mubr.f32.gmra.mrb[0].mxu0 %v1891
        %v2056 = vpop.f32.mrb[0].mxu0
        %v2057 = vadd.f32 0.0, %v2056
        %v2058 = vpop.f32.mrb[0].mxu0
        %v2059 = vadd.f32 0.0, %v2058
        %2060 = vmatprep.mubr.f32.mxu0 0.0
        %2061 = vmatmul.mubr.f32.gmra.mrb[0].mxu0 %v1894
        %v2062 = vpop.f32.mrb[0].mxu0
        %v2063 = vadd.f32 0.0, %v2062
        %v2064 = vpop.f32.mrb[0].mxu0
        %v2065 = vadd.f32 0.0, %v2064
        %2066 = vdwg.mxu0
        %2067 = vmatprep.subr.mxu0 %v1907
        %2068 = vmatpush1.msra.mxu0 %v1905
        %2069 = vmatprep.subr.mxu0 0.0
        %2070 = vmatpush1.msra.mxu0 0.0
        %2071 = vmatprep.subr.mxu0 0.0
        %2072 = vmatpush1.msra.mxu0 0.0
        %2073 = vmatprep.subr.mxu0 0.0
        %2074 = vmatpush1.msra.mxu0 0.0
        %2075 = vmatprep.subr.mxu0 0.0
        %2076 = vmatpush1.msra.mxu0 0.0
        %2077 = vmatprep.subr.mxu0 0.0
        %2078 = vmatpush1.msra.mxu0 0.0
        %2079 = vmatprep.subr.mxu0 0.0
        %2080 = vmatpush1.msra.mxu0 0.0
        %2081 = vmatprep.subr.mxu0 0.0
        %2082 = vmatpush1.msra.mxu0 0.0
        %2083 = vmatprep.subr.mxu0 0.0
        %2084 = vmatpush1.msra.mxu0 0.0
        %2085 = vmatprep.subr.mxu0 0.0
        %2086 = vmatpush1.msra.mxu0 0.0
        %2087 = vmatprep.subr.mxu0 0.0
        %2088 = vmatpush1.msra.mxu0 0.0
        %2089 = vmatprep.subr.mxu0 0.0
        %2090 = vmatpush1.msra.mxu0 0.0
        %2091 = vmatprep.subr.mxu0 0.0
        %2092 = vmatpush1.msra.mxu0 0.0
        %2093 = vmatprep.subr.mxu0 0.0
        %2094 = vmatpush1.msra.mxu0 0.0
        %2095 = vmatprep.subr.mxu0 0.0
        %2096 = vmatpush1.msra.mxu0 0.0
        %2097 = vmatprep.subr.mxu0 0.0
        %2098 = vmatpush1.msra.mxu0 0.0
        %2099 = vmatprep.subr.mxu0 0.0
        %2100 = vmatpush1.msra.mxu0 0.0
        %2101 = vmatprep.subr.mxu0 0.0
        %2102 = vmatpush1.msra.mxu0 0.0
        %2103 = vmatprep.subr.mxu0 0.0
        %2104 = vmatpush1.msra.mxu0 0.0
        %2105 = vmatprep.subr.mxu0 0.0
        %2106 = vmatpush1.msra.mxu0 0.0
        %2107 = vmatprep.subr.mxu0 0.0
        %2108 = vmatpush1.msra.mxu0 0.0
        %2109 = vmatprep.subr.mxu0 0.0
        %2110 = vmatpush1.msra.mxu0 0.0
        %2111 = vmatprep.subr.mxu0 0.0
        %2112 = vmatpush1.msra.mxu0 0.0
        %2113 = vmatprep.subr.mxu0 0.0
        %2114 = vmatpush1.msra.mxu0 0.0
        %2115 = vmatprep.subr.mxu0 0.0
        %2116 = vmatpush1.msra.mxu0 0.0
        %2117 = vmatprep.subr.mxu0 0.0
        %2118 = vmatpush1.msra.mxu0 0.0
        %2119 = vmatprep.subr.mxu0 0.0
        %2120 = vmatpush1.msra.mxu0 0.0
        %2121 = vmatprep.subr.mxu0 0.0
        %2122 = vmatpush1.msra.mxu0 0.0
        %2123 = vmatprep.subr.mxu0 0.0
        %2124 = vmatpush1.msra.mxu0 0.0
        %2125 = vmatprep.subr.mxu0 0.0
        %2126 = vmatpush1.msra.mxu0 0.0
        %2127 = vmatprep.subr.mxu0 0.0
        %2128 = vmatpush1.msra.mxu0 0.0
        %2129 = vmatprep.subr.mxu0 0.0
        %2130 = vmatpush1.msra.mxu0 0.0
        %2131 = vmatprep.mubr.f32.mxu0 0.0
        %2132 = vmatmul.mubr.f32.gmra.mrb[0].mxu0 %v1891
        %v2133 = vpop.f32.mrb[0].mxu0
        %v2134 = vadd.f32 0.0, %v2133
        %v2135 = vpop.f32.mrb[0].mxu0
        %v2136 = vadd.f32 0.0, %v2135
        %2137 = vmatprep.mubr.f32.mxu0 0.0
        %2138 = vmatmul.mubr.f32.gmra.mrb[0].mxu0 %v1894
        %v2139 = vpop.f32.mrb[0].mxu0
        %v2140 = vadd.f32 0.0, %v2139
        %v2141 = vpop.f32.mrb[0].mxu0
        %v2142 = vadd.f32 0.0, %v2141
        %2143 = vdwg.mxu0
        %2144 = vmatprep.subr.mxu0 %v1911
        %2145 = vmatpush1.msra.mxu0 %v1909
        %2146 = vmatprep.subr.mxu0 0.0
        %2147 = vmatpush1.msra.mxu0 0.0
        %2148 = vmatprep.subr.mxu0 0.0
        %2149 = vmatpush1.msra.mxu0 0.0
        %2150 = vmatprep.subr.mxu0 0.0
        %2151 = vmatpush1.msra.mxu0 0.0
        %2152 = vmatprep.subr.mxu0 0.0
        %2153 = vmatpush1.msra.mxu0 0.0
        %2154 = vmatprep.subr.mxu0 0.0
        %2155 = vmatpush1.msra.mxu0 0.0
        %2156 = vmatprep.subr.mxu0 0.0
        %2157 = vmatpush1.msra.mxu0 0.0
        %2158 = vmatprep.subr.mxu0 0.0
        %2159 = vmatpush1.msra.mxu0 0.0
        %2160 = vmatprep.subr.mxu0 0.0
        %2161 = vmatpush1.msra.mxu0 0.0
        %2162 = vmatprep.subr.mxu0 0.0
        %2163 = vmatpush1.msra.mxu0 0.0
        %2164 = vmatprep.subr.mxu0 0.0
        %2165 = vmatpush1.msra.mxu0 0.0
        %2166 = vmatprep.subr.mxu0 0.0
        %2167 = vmatpush1.msra.mxu0 0.0
        %2168 = vmatprep.subr.mxu0 0.0
        %2169 = vmatpush1.msra.mxu0 0.0
        %2170 = vmatprep.subr.mxu0 0.0
        %2171 = vmatpush1.msra.mxu0 0.0
        %2172 = vmatprep.subr.mxu0 0.0
        %2173 = vmatpush1.msra.mxu0 0.0
        %2174 = vmatprep.subr.mxu0 0.0
        %2175 = vmatpush1.msra.mxu0 0.0
        %2176 = vmatprep.subr.mxu0 0.0
        %2177 = vmatpush1.msra.mxu0 0.0
        %2178 = vmatprep.subr.mxu0 0.0
        %2179 = vmatpush1.msra.mxu0 0.0
        %2180 = vmatprep.subr.mxu0 0.0
        %2181 = vmatpush1.msra.mxu0 0.0
        %2182 = vmatprep.subr.mxu0 0.0
        %2183 = vmatpush1.msra.mxu0 0.0
        %2184 = vmatprep.subr.mxu0 0.0
        %2185 = vmatpush1.msra.mxu0 0.0
        %2186 = vmatprep.subr.mxu0 0.0
        %2187 = vmatpush1.msra.mxu0 0.0
        %2188 = vmatprep.subr.mxu0 0.0
        %2189 = vmatpush1.msra.mxu0 0.0
        %2190 = vmatprep.subr.mxu0 0.0
        %2191 = vmatpush1.msra.mxu0 0.0
        %2192 = vmatprep.subr.mxu0 0.0
        %2193 = vmatpush1.msra.mxu0 0.0
        %2194 = vmatprep.subr.mxu0 0.0
        %2195 = vmatpush1.msra.mxu0 0.0
        %2196 = vmatprep.subr.mxu0 0.0
        %2197 = vmatpush1.msra.mxu0 0.0
        %2198 = vmatprep.subr.mxu0 0.0
        %2199 = vmatpush1.msra.mxu0 0.0
        %2200 = vmatprep.subr.mxu0 0.0
        %2201 = vmatpush1.msra.mxu0 0.0
        %2202 = vmatprep.subr.mxu0 0.0
        %2203 = vmatpush1.msra.mxu0 0.0
        %2204 = vmatprep.subr.mxu0 0.0
        %2205 = vmatpush1.msra.mxu0 0.0
        %2206 = vmatprep.subr.mxu0 0.0
        %2207 = vmatpush1.msra.mxu0 0.0
        %2208 = vmatprep.mubr.f32.mxu0 0.0
        %2209 = vmatmul.mubr.f32.gmra.mrb[0].mxu0 %v1891
        %v2210 = vpop.f32.mrb[0].mxu0
        %v2211 = vadd.f32 0.0, %v2210
        %v2212 = vpop.f32.mrb[0].mxu0
        %v2213 = vadd.f32 0.0, %v2212
        %2214 = vmatprep.mubr.f32.mxu0 0.0
        %2215 = vmatmul.mubr.f32.gmra.mrb[0].mxu0 %v1894
        %v2216 = vpop.f32.mrb[0].mxu0
        %v2217 = vadd.f32 0.0, %v2216
        %v2218 = vpop.f32.mrb[0].mxu0
        %v2219 = vadd.f32 0.0, %v2218
        %2220 = vdwg.mxu0
        %v2221 = vmul.f32 %v1236, %v1980
        %v2222 = vmul.f32 %v1237, %v1982
        %v2223 = vmul.f32 %v1238, %v2057
        %v2224 = vmul.f32 %v1239, %v2059
        %v2225 = vmul.f32 %v1240, %v2134
        %v2226 = vmul.f32 %v1241, %v2136
        %v2227 = vmul.f32 %v1242, %v2211
        %v2228 = vmul.f32 %v1243, %v2213
        %v2229 = vmul.f32 %v1244, %v1986
        %v2230 = vmul.f32 %v1245, %v1988
        %v2231 = vmul.f32 %v1246, %v2063
        %v2232 = vmul.f32 %v1247, %v2065
        %v2233 = vmul.f32 %v1248, %v2140
        %v2234 = vmul.f32 %v1249, %v2142
        %v2235 = vmul.f32 %v1250, %v2217
        %v2236 = vmul.f32 %v1251, %v2219
        %v2237 = vpack.c.bf16 %v2229, %v2221
        %v2238 = vpack.c.bf16 %v2230, %v2222
        %v2239 = vpack.c.bf16 %v2231, %v2223
        %v2240 = vpack.c.bf16 %v2232, %v2224
        %v2241 = vpack.c.bf16 %v2233, %v2225
        %v2242 = vpack.c.bf16 %v2234, %v2226
        %v2243 = vpack.c.bf16 %v2235, %v2227
        %v2244 = vpack.c.bf16 %v2236, %v2228
        %v2245 = vld [vmem:[%s3] sm:$0x3]
        %2247 = vset.pattern.permute.xlu0 3
        %2248 = vperm.xlu0 %2247, %v953
        %v2249 = vpop.permute.xlu0 %2248
        %v2252 = vsel %vm1690, %v2245, 0
        %2254 = vmatprep.subr.bf16.mxu0 %v2238
        %2255 = vmatpush1.bf16.msra.mxu0 %v2237
        %2256 = vmatprep.subr.bf16.mxu0 0
        %2257 = vmatpush1.bf16.msra.mxu0 0
        %2258 = vmatprep.subr.bf16.mxu0 0
        %2259 = vmatpush1.bf16.msra.mxu0 0
        %2260 = vmatprep.subr.bf16.mxu0 0
        %2261 = vmatpush1.bf16.msra.mxu0 0
        %2262 = vmatprep.subr.bf16.mxu0 0
        %2263 = vmatpush1.bf16.msra.mxu0 0
        %2264 = vmatprep.subr.bf16.mxu0 0
        %2265 = vmatpush1.bf16.msra.mxu0 0
        %2266 = vmatprep.subr.bf16.mxu0 0
        %2267 = vmatpush1.bf16.msra.mxu0 0
        %2268 = vmatprep.subr.bf16.mxu0 0
        %2269 = vmatpush1.bf16.msra.mxu0 0
        %2270 = vmatprep.subr.bf16.mxu0 0
        %2271 = vmatpush1.bf16.msra.mxu0 0
        %2272 = vmatprep.subr.bf16.mxu0 0
        %2273 = vmatpush1.bf16.msra.mxu0 0
        %2274 = vmatprep.subr.bf16.mxu0 0
        %2275 = vmatpush1.bf16.msra.mxu0 0
        %2276 = vmatprep.subr.bf16.mxu0 0
        %2277 = vmatpush1.bf16.msra.mxu0 0
        %2278 = vmatprep.subr.bf16.mxu0 0
        %2279 = vmatpush1.bf16.msra.mxu0 0
        %2280 = vmatprep.subr.bf16.mxu0 0
        %2281 = vmatpush1.bf16.msra.mxu0 0
        %2282 = vmatprep.subr.bf16.mxu0 0
        %2283 = vmatpush1.bf16.msra.mxu0 0
        %2284 = vmatprep.subr.bf16.mxu0 0
        %2285 = vmatpush1.bf16.msra.mxu0 0
        %2286 = vmatprep.mubr.bf16.mxu0 0
        %2287 = vmatmul.mubr.bf16.gmra.mrb[0].mxu0 %v2252
        %v2288 = vpop.f32.mrb[0].mxu0
        %v2289 = vadd.f32 %v2249, %v2288
        %v2290 = vpop.f32.mrb[0].mxu0
        %v2291 = vadd.f32 %v2249, %v2290
        %v2292 = vpop.f32.mrb[0].mxu0
        %v2293 = vpop.f32.mrb[0].mxu0
        %2294 = vdwg.mxu0
        %2295 = vmatprep.subr.bf16.mxu0 %v2240
        %2296 = vmatpush1.bf16.msra.mxu0 %v2239
        %2297 = vmatprep.subr.bf16.mxu0 0
        %2298 = vmatpush1.bf16.msra.mxu0 0
        %2299 = vmatprep.subr.bf16.mxu0 0
        %2300 = vmatpush1.bf16.msra.mxu0 0
        %2301 = vmatprep.subr.bf16.mxu0 0
        %2302 = vmatpush1.bf16.msra.mxu0 0
        %2303 = vmatprep.subr.bf16.mxu0 0
        %2304 = vmatpush1.bf16.msra.mxu0 0
        %2305 = vmatprep.subr.bf16.mxu0 0
        %2306 = vmatpush1.bf16.msra.mxu0 0
        %2307 = vmatprep.subr.bf16.mxu0 0
        %2308 = vmatpush1.bf16.msra.mxu0 0
        %2309 = vmatprep.subr.bf16.mxu0 0
        %2310 = vmatpush1.bf16.msra.mxu0 0
        %2311 = vmatprep.subr.bf16.mxu0 0
        %2312 = vmatpush1.bf16.msra.mxu0 0
        %2313 = vmatprep.subr.bf16.mxu0 0
        %2314 = vmatpush1.bf16.msra.mxu0 0
        %2315 = vmatprep.subr.bf16.mxu0 0
        %2316 = vmatpush1.bf16.msra.mxu0 0
        %2317 = vmatprep.subr.bf16.mxu0 0
        %2318 = vmatpush1.bf16.msra.mxu0 0
        %2319 = vmatprep.subr.bf16.mxu0 0
        %2320 = vmatpush1.bf16.msra.mxu0 0
        %2321 = vmatprep.subr.bf16.mxu0 0
        %2322 = vmatpush1.bf16.msra.mxu0 0
        %2323 = vmatprep.subr.bf16.mxu0 0
        %2324 = vmatpush1.bf16.msra.mxu0 0
        %2325 = vmatprep.subr.bf16.mxu0 0
        %2326 = vmatpush1.bf16.msra.mxu0 0
        %2327 = vmatprep.mubr.bf16.mxu0 0
        %2328 = vmatmul.mubr.bf16.gmra.mrb[0].mxu0 %v2252
        %v2329 = vpop.f32.mrb[0].mxu0
        %v2330 = vadd.f32 %v2249, %v2329
        %v2331 = vpop.f32.mrb[0].mxu0
        %v2332 = vadd.f32 %v2249, %v2331
        %v2333 = vpop.f32.mrb[0].mxu0
        %v2334 = vpop.f32.mrb[0].mxu0
        %2335 = vdwg.mxu0
        %2336 = vmatprep.subr.bf16.mxu0 %v2242
        %2337 = vmatpush1.bf16.msra.mxu0 %v2241
        %2338 = vmatprep.subr.bf16.mxu0 0
        %2339 = vmatpush1.bf16.msra.mxu0 0
        %2340 = vmatprep.subr.bf16.mxu0 0
        %2341 = vmatpush1.bf16.msra.mxu0 0
        %2342 = vmatprep.subr.bf16.mxu0 0
        %2343 = vmatpush1.bf16.msra.mxu0 0
        %2344 = vmatprep.subr.bf16.mxu0 0
        %2345 = vmatpush1.bf16.msra.mxu0 0
        %2346 = vmatprep.subr.bf16.mxu0 0
        %2347 = vmatpush1.bf16.msra.mxu0 0
        %2348 = vmatprep.subr.bf16.mxu0 0
        %2349 = vmatpush1.bf16.msra.mxu0 0
        %2350 = vmatprep.subr.bf16.mxu0 0
        %2351 = vmatpush1.bf16.msra.mxu0 0
        %2352 = vmatprep.subr.bf16.mxu0 0
        %2353 = vmatpush1.bf16.msra.mxu0 0
        %2354 = vmatprep.subr.bf16.mxu0 0
        %2355 = vmatpush1.bf16.msra.mxu0 0
        %2356 = vmatprep.subr.bf16.mxu0 0
        %2357 = vmatpush1.bf16.msra.mxu0 0
        %2358 = vmatprep.subr.bf16.mxu0 0
        %2359 = vmatpush1.bf16.msra.mxu0 0
        %2360 = vmatprep.subr.bf16.mxu0 0
        %2361 = vmatpush1.bf16.msra.mxu0 0
        %2362 = vmatprep.subr.bf16.mxu0 0
        %2363 = vmatpush1.bf16.msra.mxu0 0
        %2364 = vmatprep.subr.bf16.mxu0 0
        %2365 = vmatpush1.bf16.msra.mxu0 0
        %2366 = vmatprep.subr.bf16.mxu0 0
        %2367 = vmatpush1.bf16.msra.mxu0 0
        %2368 = vmatprep.mubr.bf16.mxu0 0
        %2369 = vmatmul.mubr.bf16.gmra.mrb[0].mxu0 %v2252
        %v2370 = vpop.f32.mrb[0].mxu0
        %v2371 = vadd.f32 %v2249, %v2370
        %v2372 = vpop.f32.mrb[0].mxu0
        %v2373 = vadd.f32 %v2249, %v2372
        %v2374 = vpop.f32.mrb[0].mxu0
        %v2375 = vpop.f32.mrb[0].mxu0
        %2376 = vdwg.mxu0
        %2377 = vmatprep.subr.bf16.mxu0 %v2244
        %2378 = vmatpush1.bf16.msra.mxu0 %v2243
        %2379 = vmatprep.subr.bf16.mxu0 0
        %2380 = vmatpush1.bf16.msra.mxu0 0
        %2381 = vmatprep.subr.bf16.mxu0 0
        %2382 = vmatpush1.bf16.msra.mxu0 0
        %2383 = vmatprep.subr.bf16.mxu0 0
        %2384 = vmatpush1.bf16.msra.mxu0 0
        %2385 = vmatprep.subr.bf16.mxu0 0
        %2386 = vmatpush1.bf16.msra.mxu0 0
        %2387 = vmatprep.subr.bf16.mxu0 0
        %2388 = vmatpush1.bf16.msra.mxu0 0
        %2389 = vmatprep.subr.bf16.mxu0 0
        %2390 = vmatpush1.bf16.msra.mxu0 0
        %2391 = vmatprep.subr.bf16.mxu0 0
        %2392 = vmatpush1.bf16.msra.mxu0 0
        %2393 = vmatprep.subr.bf16.mxu0 0
        %2394 = vmatpush1.bf16.msra.mxu0 0
        %2395 = vmatprep.subr.bf16.mxu0 0
        %2396 = vmatpush1.bf16.msra.mxu0 0
        %2397 = vmatprep.subr.bf16.mxu0 0
        %2398 = vmatpush1.bf16.msra.mxu0 0
        %2399 = vmatprep.subr.bf16.mxu0 0
        %2400 = vmatpush1.bf16.msra.mxu0 0
        %2401 = vmatprep.subr.bf16.mxu0 0
        %2402 = vmatpush1.bf16.msra.mxu0 0
        %2403 = vmatprep.subr.bf16.mxu0 0
        %2404 = vmatpush1.bf16.msra.mxu0 0
        %2405 = vmatprep.subr.bf16.mxu0 0
        %2406 = vmatpush1.bf16.msra.mxu0 0
        %2407 = vmatprep.subr.bf16.mxu0 0
        %2408 = vmatpush1.bf16.msra.mxu0 0
        %2409 = vmatprep.mubr.bf16.mxu0 0
        %2410 = vmatmul.mubr.bf16.gmra.mrb[0].mxu0 %v2252
        %v2411 = vpop.f32.mrb[0].mxu0
        %v2412 = vadd.f32 %v2249, %v2411
        %v2413 = vpop.f32.mrb[0].mxu0
        %v2414 = vadd.f32 %v2249, %v2413
        %v2415 = vpop.f32.mrb[0].mxu0
        %v2416 = vpop.f32.mrb[0].mxu0
        %2417 = vdwg.mxu0
        %v2418 = vmax.f32 %v2289, 0.0
        %v2419 = vmax.f32 %v2291, 0.0
        %v2420 = vmax.f32 %v2330, 0.0
        %v2421 = vmax.f32 %v2332, 0.0
        %v2422 = vmax.f32 %v2371, 0.0
        %v2423 = vmax.f32 %v2373, 0.0
        %v2424 = vmax.f32 %v2412, 0.0
        %v2425 = vmax.f32 %v2414, 0.0
        %v2434 = vcombine.low %v2418, %v2419
        %v2435 = vcombine.low %v2420, %v2421
        %v2436 = vcombine.low %v2422, %v2423
        %v2437 = vcombine.low %v2424, %v2425
        %v2442 = vadd.f32 %v278, %v2434
        %v2443 = vadd.f32 %v279, %v2435
        %v2444 = vadd.f32 %v280, %v2436
        %v2445 = vadd.f32 %v281, %v2437
        %2446 = vst [vmem:[%s271] sm:$0xff] %v2442
        %2447 = vst [vmem:[%s271 + $0x8] sm:$0xff] %v2443
        %2448 = vst [vmem:[%s271 + $0x10] sm:$0xff] %v2444
        %2449 = vst [vmem:[%s271 + $0x18] sm:$0xff] %v2445
        %s2450 = sand.u32 %s181, 1
        %s2451 = scalar_lea.sflag [#allocation4], %s2450
        %s2452 = sand.u32 %s181, 1
        %s2453 = smul.addr %s2452, 32
        %s2454 = scalar_lea.vmem [#allocation3], %s2453
        // Predicated region
        $region49: #{tpu_custom_call.1} parent=47 // pred_check
          %p2455 = pneg %p191
        $region50: #{tpu_custom_call.1} parent=47 // pred_check_branch
          %2457 = sbr.rel (%p2455) target = $region52
        $region51: #{tpu_custom_call.1} parent=47 // pred_region
          %s2459 = ssub.s32 512, 512
          %2460 = vsyncadd %s2451, %s2459
          %s2461 = smul.addr %s21, 8
          %s2462 = smul.addr %s2461, 64
          %s2463 = scalar_lea.hbm %s7, %s2462
          %s2465 = sshll.u32 %s2454, 4
          %s2466 = int_to_ptr.vmem [resolvable:$true] %s2465
          %2468 = dma.vmem_to_hbm [thread:$0]  %s2466, 512, %s2463, %s2451
        $region52: #{tpu_custom_call.1} parent=47 // pred_fallthru
          _
      $region48: #{tpu_custom_call.1} parent=5 // pred_fallthru
        _
      %p2469 = scmp.le.s32.totalorder 2, %s16
      // Predicated region
      $region53: #{tpu_custom_call.1} parent=5 // pred_check
        %p2470 = pneg %p2469
      $region54: #{tpu_custom_call.1} parent=5 // pred_check_branch
        %2472 = sbr.rel (%p2470) target = $region56
      $region55: #{tpu_custom_call.1} parent=5 // pred_region
        %s2473 = ssub.s32 %s16, 2
        // Predicated region
        $region57: #{tpu_custom_call.1} parent=55 // pred_check
          %p2474 = pneg %p197
        $region58: #{tpu_custom_call.1} parent=55 // pred_check_branch
          %2476 = sbr.rel (%p2474) target = $region60
        $region59: #{tpu_custom_call.1} parent=55 // pred_region
          %s2477 = sand.u32 %s182, 1
          %s2478 = scalar_lea.sflag [#allocation4], %s2477
          %s2479 = sand.u32 %s182, 1
          %s2480 = smul.addr %s2479, 32
          %s2481 = scalar_lea.vmem [#allocation3], %s2480
          %2482 = dma.done %s2478, 512
        $region60: #{tpu_custom_call.1} parent=55 // pred_fallthru
          _
      $region56: #{tpu_custom_call.1} parent=5 // pred_fallthru
        _
    $region6: #{tpu_custom_call.1} parent=1 // loop_footer
      %s20 = sadd.s32 1, %s16
    $region7: #{tpu_custom_call.1} parent=1 // loop_footer_branch
      %15 = sbr.rel target = $region3
    $region8: #{tpu_custom_call.1} parent=1 // loop_exit
      _
    %2483 = vsyncpa [#allocation4], 1
    %s2484 = scalar_lea.sflag [#allocation4], 1
    %2485 = vsyncpa %s2484, 1

</llo_original>
